<compile_context>
chip_gen: v7x
topology: tpu7x:2x2x1
jax: 0.10.0
libtpu: 0.0.40
codegen_flags: <defaults>
</compile_context>

<pallas_src>
import numpy as np
import jax
import jax.numpy as jnp
from jax.experimental import pallas as pl
from jax.experimental.pallas import tpu as pltpu

INPUT_DIM = 16          # L (must be divisible by 4: two stride-2 maxpools)
BATCH = 2
C1, C2 = 20, 50         # conv channel counts
K = 5                   # conv kernel size (padding=2 -> "same")
HID, OUT10 = 500, 10    # dense3 / linear sizes
C1P, C2P, HIDP = 128, 128, 512   # lane-padded channel sizes
OUTP = 128              # lane-dense output width (real outputs in cols 0..4)
RB = 8                  # sublane-aligned row block (batch padded 2 -> 8)


def _lenet_kernel(xcol_ref, xlast_ref, w1_ref, b1_ref, w2_ref, b2_ref,
                  w3_hbm, b3_ref, w45_hbm, wlast_ref, b45_ref,
                  out_ref, w3_vmem, w45_vmem, sem):
    f32 = jnp.float32
    rb = out_ref.shape[0]                    # 8 (sublane-aligned row block)
    L = xcol_ref.shape[0] // rb              # 16
    L2, L4 = L // 2, L // 4

    # Prefetch the big dense weights (HBM -> VMEM) while the conv stage runs.
    cp3 = pltpu.make_async_copy(w3_hbm, w3_vmem, sem.at[0])
    cp45 = pltpu.make_async_copy(w45_hbm, w45_vmem, sem.at[1])
    cp3.start()
    cp45.start()

    def shift_rows(a, n):
        # out[r, :] = a[r + n, :], zero-filled outside [0, R).  n is a static
        # multiple of rb=8, so this is whole-(8,128)-tile data movement.  In the
        # length-major layout this shifts every batch element by n/rb length
        # positions with correct conv zero padding.
        if n == 0:
            return a
        R, C = a.shape
        z = jnp.zeros((abs(n), C), a.dtype)
        if n > 0:
            return jnp.concatenate([a[n:, :], z], axis=0)
        return jnp.concatenate([z, a[:R + n, :]], axis=0)

    def maxpool2(a):
        # MaxPool1d(kernel=2, stride=2) on a length-major slab with rb rows per
        # length position: one VPU max + aligned 8-row block re-pack.
        m = jnp.maximum(a, shift_rows(a, rb))
        parts = [m[2 * j * rb:(2 * j + 1) * rb, :]
                 for j in range(a.shape[0] // (2 * rb))]
        return jnp.concatenate(parts, axis=0)

    # ---- conv1: Conv1d(1 -> C1, k=5, pad=2) as one im2col matmul.
    h1 = (jnp.dot(xcol_ref[...], w1_ref[...], preferred_element_type=f32)
          + b1_ref[...])                                      # (rb*L, C1P)

    # ---- maxpool1 -> (rb*L2, C1P)
    p1 = maxpool2(h1)

    # ---- conv2: Conv1d(C1 -> C2, k=5, pad=2), 5 taps fused into one deep-K
    # matmul: lane-concat the shifted slabs -> (rb*L2, 5*C1P) @ (5*C1P, C2P).
    p1cat = jnp.concatenate(
        [shift_rows(p1, (k - 2) * rb) for k in range(K)], axis=1)
    h2 = (jnp.dot(p1cat.astype(w2_ref.dtype), w2_ref[...],
                  preferred_element_type=f32) + b2_ref[...])  # (rb*L2, C2P)

    # ---- maxpool2 -> (rb*L4, C2P)
    p2 = maxpool2(h2)

    # ---- flatten: lane-concat the L4 length positions -> (rb, L4*C2P)
    feat = jnp.concatenate([p2[l * rb:(l + 1) * rb, :] for l in range(L4)],
                           axis=1)

    # ---- dense3 + relu (weights arrive via the async copy started above)
    cp3.wait()
    z3 = jnp.maximum(
        jnp.dot(feat.astype(w3_vmem.dtype), w3_vmem[...],
                preferred_element_type=f32) + b3_ref[...], 0.0)   # (rb, HIDP)

    # ---- linear(500->10) + cat(x[:, :, -1]) + final1/final2 folded into one
    # (rb, HIDP) @ (HIDP, OUTP) matmul; |.| applied on lanes 2..4.
    cp45.wait()
    pre = (jnp.dot(z3.astype(w45_vmem.dtype), w45_vmem[...],
                   preferred_element_type=f32)
           + xlast_ref[...] * wlast_ref[...] + b45_ref[...])      # (rb, OUTP)
    lane = jax.lax.broadcasted_iota(jnp.int32, pre.shape, 1)
    absm = jnp.logical_and(lane >= 2, lane < 5)
    out_ref[...] = jnp.where(absm, jnp.abs(pre), pre)


def pack_params(params):
    """Repack PyTorch-layout params into TPU-friendly slabs.  Call ONCE."""
    (w1, b1, w2, b2, w3, b3, w4, b4, wf1, bf1, wf2, bf2) = [
        jnp.asarray(p, jnp.float32) for p in params]
    L4 = INPUT_DIM // 4
    # conv1: (C1,1,K) -> im2col taps (8, C1P); rows K..7 zero.
    w1p = jnp.zeros((8, C1P), jnp.float32).at[:K, :C1].set(
        jnp.transpose(w1[:, 0, :], (1, 0)))
    b1p = jnp.pad(b1, (0, C1P - C1))[None, :]
    # conv2: (C2,C1,K) -> fused (K*C1P, C2P), row index = k*C1P + c_in.
    w2t = jnp.transpose(w2, (2, 1, 0))                              # (K,C1,C2)
    w2cat = jnp.pad(w2t, ((0, 0), (0, C1P - C1), (0, C2P - C2))
                    ).reshape(K * C1P, C2P).astype(jnp.bfloat16)
    b2p = jnp.pad(b2, (0, C2P - C2))[None, :]
    # dense3: (HID, C2*L4) -> (L4*C2P, HIDP); row = l*C2P + c matches the
    # kernel's lane-concat flatten order (PyTorch flatten index = c*L4 + l).
    w3r = jnp.transpose(w3.reshape(HID, C2, L4), (2, 1, 0))         # (L4,C2,HID)
    w3r = jnp.pad(w3r, ((0, 0), (0, C2P - C2), (0, HIDP - HID)))
    w3flat = w3r.reshape(L4 * C2P, HIDP).astype(jnp.bfloat16)
    b3p = jnp.pad(b3, (0, HIDP - HID))[None, :]
    # linear(500->10) + the two heads, folded:
    #   out5 = z3 @ (w4.T @ wf_cat[:10]) + x_last * wf_cat[10]
    #          + (b4 @ wf_cat[:10] + bf_cat)
    wf_cat = jnp.concatenate([wf1.T, wf2.T], axis=1)                # (11, 5)
    bf_cat = jnp.concatenate([bf1, bf2])[None, :]                   # (1, 5)
    w45 = w4.T @ wf_cat[:OUT10, :]                                  # (HID, 5)
    w45p = jnp.zeros((HIDP, OUTP), jnp.float32).at[:HID, :5].set(
        w45).astype(jnp.bfloat16)
    b45 = b4[None, :] @ wf_cat[:OUT10, :] + bf_cat                  # (1, 5)
    b45p = jnp.pad(b45, ((0, 0), (0, OUTP - 5)))
    wlastp = jnp.pad(wf_cat[OUT10:OUT10 + 1, :], ((0, 0), (0, OUTP - 5)))
    packed = (w1p, b1p, w2cat, b2p, w3flat, b3p, w45p, wlastp, b45p)
    return tuple(jax.device_put(jax.block_until_ready(a)) for a in packed)


def _prep_inputs(x):
    """Per-call input prep: im2col + length-major layout + batch pad to RB."""
    x = jnp.asarray(x, jnp.float32)
    B, _, L = x.shape
    xp = jnp.pad(x[:, 0, :], ((0, RB - B), (K // 2, K // 2)))       # (RB, L+4)
    cols = jnp.stack([xp[:, k:k + L] for k in range(K)], axis=-1)   # (RB, L, K)
    cols = jnp.transpose(cols, (1, 0, 2)).reshape(L * RB, K)        # length-major
    xcol = jnp.pad(cols, ((0, 0), (0, 8 - K)))                      # (L*RB, 8)
    xlast = jnp.pad(x[:, 0, L - 1:L], ((0, RB - B), (0, 0)))        # (RB, 1)
    return xcol, xlast


@jax.jit
def lenet_forward(x, packed):
    """x: (B, 1, L) float32, PyTorch NCL layout (B <= 8). Returns (B, 5)."""
    B = x.shape[0]
    xcol, xlast = _prep_inputs(x)
    args = (xcol, xlast) + tuple(packed)
    vmem = pl.BlockSpec(memory_space=pltpu.MemorySpace.VMEM)
    hbm = pl.BlockSpec(memory_space=pl.ANY)
    in_specs = [vmem, vmem,          # xcol, xlast
                vmem, vmem,          # w1p, b1p
                vmem, vmem,          # w2cat, b2p
                hbm, vmem,           # w3flat (prefetched in-kernel), b3p
                hbm, vmem, vmem]     # w45p (prefetched in-kernel), wlast, b45p
    out = pl.pallas_call(
        _lenet_kernel,
        out_shape=jax.ShapeDtypeStruct((RB, OUTP), jnp.float32),
        in_specs=in_specs,
        out_specs=pl.BlockSpec(memory_space=pltpu.MemorySpace.VMEM),
        scratch_shapes=[
            pltpu.VMEM(((INPUT_DIM // 4) * C2P, HIDP), jnp.bfloat16),
            pltpu.VMEM((HIDP, OUTP), jnp.bfloat16),
            pltpu.SemaphoreType.DMA((2,)),
        ],
    )(*args)
    return out[:B, :5]


def init_params(rng):
    def lin(fan_in, shape):
        bound = 1.0 / np.sqrt(fan_in)
        return rng.uniform(-bound, bound, size=shape).astype(np.float32)
    w1 = lin(1 * K, (C1, 1, K));   b1 = lin(1 * K, (C1,))
    w2 = lin(C1 * K, (C2, C1, K)); b2 = lin(C1 * K, (C2,))
    d3_in = (INPUT_DIM // 4) * C2
    w3 = lin(d3_in, (HID, d3_in)); b3 = lin(d3_in, (HID,))
    w4 = lin(HID, (OUT10, HID));   b4 = lin(HID, (OUT10,))
    wf1 = lin(11, (2, 11));        bf1 = lin(11, (2,))
    wf2 = lin(11, (3, 11));        bf2 = lin(11, (3,))
    return (w1, b1, w2, b2, w3, b3, w4, b4, wf1, bf1, wf2, bf2)


def lenet_reference(x, params):
    """Pure numpy mirror of the PyTorch forward pass (for verification)."""
    w1, b1, w2, b2, w3, b3, w4, b4, wf1, bf1, wf2, bf2 = params
    B, _, L = x.shape
    xp = np.pad(x, ((0, 0), (0, 0), (2, 2)))
    h1 = np.zeros((B, C1, L), np.float32)
    for l in range(L):
        h1[:, :, l] = b1 + np.einsum('ok,bk->bo', w1[:, 0, :], xp[:, 0, l:l + K])
    p1 = np.maximum(h1[:, :, 0::2], h1[:, :, 1::2])
    L2 = L // 2
    p1p = np.pad(p1, ((0, 0), (0, 0), (2, 2)))
    h2 = np.zeros((B, C2, L2), np.float32)
    for l in range(L2):
        h2[:, :, l] = b2 + np.einsum('ock,bck->bo', w2, p1p[:, :, l:l + K])
    p2 = np.maximum(h2[:, :, 0::2], h2[:, :, 1::2])
    feat = p2.reshape(B, -1)
    z3 = np.maximum(feat @ w3.T + b3, 0.0)
    z4 = z3 @ w4.T + b4
    oc = np.concatenate([z4, x[:, 0, -1:]], axis=1)
    f1 = oc @ wf1.T + bf1
    f2 = np.abs(oc @ wf2.T + bf2)
    return np.concatenate([f1, f2], axis=1).astype(np.float32)


if __name__ == "__main__":
    rng = np.random.default_rng(1234)
    params = init_params(rng)
    packed = pack_params(params)        # hoisted: packs once, off the hot path

    key = jax.random.PRNGKey(0)
    x = jax.random.normal(key, (BATCH, 1, INPUT_DIM), dtype=jnp.float32)

    out = jax.block_until_ready(lenet_forward(x, packed))   # compile + run
    out = jax.block_until_ready(lenet_forward(x, packed))   # steady-state call

    ref = lenet_reference(np.asarray(x), params)
    if not np.allclose(np.asarray(out), ref, rtol=2e-2, atol=2e-2):
        raise AssertionError(f"mismatch:\nkernel=\n{np.asarray(out)}\nref=\n{ref}")
    print("KERNEL_OK")
</pallas_src>

<mosaic_0001>
module attributes {stable_mosaic.version = 11 : i64} {
  func.func @_lenet_kernel(%arg0: memref<128x8xf32, #tpu.memory_space<vmem>>, %arg1: memref<8x1xf32, #tpu.memory_space<vmem>>, %arg2: memref<8x128xf32, #tpu.memory_space<vmem>>, %arg3: memref<1x128xf32, #tpu.memory_space<vmem>>, %arg4: memref<640x128xbf16, #tpu.memory_space<vmem>>, %arg5: memref<1x128xf32, #tpu.memory_space<vmem>>, %arg6: memref<512x512xbf16, #tpu.memory_space<any>>, %arg7: memref<1x512xf32, #tpu.memory_space<vmem>>, %arg8: memref<512x128xbf16, #tpu.memory_space<any>>, %arg9: memref<1x128xf32, #tpu.memory_space<vmem>>, %arg10: memref<1x128xf32, #tpu.memory_space<vmem>>, %arg11: memref<8x128xf32, #tpu.memory_space<vmem>>, %arg12: memref<512x512xbf16, #tpu.memory_space<vmem>>, %arg13: memref<512x128xbf16, #tpu.memory_space<vmem>>, %arg14: memref<2x!tpu.dma_semaphore, #tpu.memory_space<semaphore_mem>>) attributes {dimension_semantics = [], scalar_prefetch = 0 : i64, scratch_operands = 3 : i64, tpu.core_type = #tpu.core_type<tc>} {
    %c0_i32 = arith.constant 0 : i32
    %0 = tpu.memref_slice %arg14[%c0_i32] : memref<2x!tpu.dma_semaphore, #tpu.memory_space<semaphore_mem>> -> memref<1x!tpu.dma_semaphore, #tpu.memory_space<semaphore_mem>>
    %1 = tpu.memref_squeeze %0 : memref<1x!tpu.dma_semaphore, #tpu.memory_space<semaphore_mem>> -> memref<!tpu.dma_semaphore, #tpu.memory_space<semaphore_mem>>
    tpu.enqueue_dma source(%arg6 : memref<512x512xbf16, #tpu.memory_space<any>>) target(%arg12 : memref<512x512xbf16, #tpu.memory_space<vmem>>) target_semaphore(%1 : memref<!tpu.dma_semaphore, #tpu.memory_space<semaphore_mem>>)
    %c1_i32 = arith.constant 1 : i32
    %2 = tpu.memref_slice %arg14[%c1_i32] : memref<2x!tpu.dma_semaphore, #tpu.memory_space<semaphore_mem>> -> memref<1x!tpu.dma_semaphore, #tpu.memory_space<semaphore_mem>>
    %3 = tpu.memref_squeeze %2 : memref<1x!tpu.dma_semaphore, #tpu.memory_space<semaphore_mem>> -> memref<!tpu.dma_semaphore, #tpu.memory_space<semaphore_mem>>
    tpu.enqueue_dma source(%arg8 : memref<512x128xbf16, #tpu.memory_space<any>>) target(%arg13 : memref<512x128xbf16, #tpu.memory_space<vmem>>) target_semaphore(%3 : memref<!tpu.dma_semaphore, #tpu.memory_space<semaphore_mem>>)
    %c0 = arith.constant 0 : index
    %c0_0 = arith.constant 0 : index
    %4 = vector.load %arg0[%c0, %c0_0] : memref<128x8xf32, #tpu.memory_space<vmem>>, vector<128x8xf32>
    %c0_1 = arith.constant 0 : index
    %c0_2 = arith.constant 0 : index
    %5 = vector.load %arg2[%c0_1, %c0_2] : memref<8x128xf32, #tpu.memory_space<vmem>>, vector<8x128xf32>
    %cst = arith.constant dense<0.000000e+00> : vector<128x128xf32>
    %6 = tpu.matmul %4, %5, %cst {dimension_numbers = #tpu.dot_dimension_numbers<[1], [0], [0], [1], [0, 0, 1, 1], [], []>} : vector<128x8xf32>, vector<8x128xf32>, vector<128x128xf32> -> vector<128x128xf32>
    %c0_3 = arith.constant 0 : index
    %c0_4 = arith.constant 0 : index
    %7 = vector.load %arg3[%c0_3, %c0_4] : memref<1x128xf32, #tpu.memory_space<vmem>>, vector<1x128xf32>
    %8 = vector.broadcast %7 : vector<1x128xf32> to vector<128x128xf32>
    %9 = arith.addf %6, %8 : vector<128x128xf32>
    %cst_5 = arith.constant 0.000000e+00 : f32
    %10 = vector.broadcast %cst_5 : f32 to vector<8x128xf32>
    %11 = vector.extract_strided_slice %9 {offsets = [8, 0], sizes = [120, 128], strides = [1, 1]} : vector<128x128xf32> to vector<120x128xf32>
    %12 = tpu.concatenate %11, %10 in 0 : vector<120x128xf32>, vector<8x128xf32> -> vector<128x128xf32>
    %13 = arith.maximumf %9, %12 : vector<128x128xf32>
    %14 = vector.extract_strided_slice %13 {offsets = [0, 0], sizes = [8, 128], strides = [1, 1]} : vector<128x128xf32> to vector<8x128xf32>
    %15 = vector.extract_strided_slice %13 {offsets = [16, 0], sizes = [8, 128], strides = [1, 1]} : vector<128x128xf32> to vector<8x128xf32>
    %16 = vector.extract_strided_slice %13 {offsets = [32, 0], sizes = [8, 128], strides = [1, 1]} : vector<128x128xf32> to vector<8x128xf32>
    %17 = vector.extract_strided_slice %13 {offsets = [48, 0], sizes = [8, 128], strides = [1, 1]} : vector<128x128xf32> to vector<8x128xf32>
    %18 = vector.extract_strided_slice %13 {offsets = [64, 0], sizes = [8, 128], strides = [1, 1]} : vector<128x128xf32> to vector<8x128xf32>
    %19 = vector.extract_strided_slice %13 {offsets = [80, 0], sizes = [8, 128], strides = [1, 1]} : vector<128x128xf32> to vector<8x128xf32>
    %20 = vector.extract_strided_slice %13 {offsets = [96, 0], sizes = [8, 128], strides = [1, 1]} : vector<128x128xf32> to vector<8x128xf32>
    %21 = vector.extract_strided_slice %13 {offsets = [112, 0], sizes = [8, 128], strides = [1, 1]} : vector<128x128xf32> to vector<8x128xf32>
    %22 = tpu.concatenate %14, %15, %16, %17, %18, %19, %20, %21 in 0 : vector<8x128xf32>, vector<8x128xf32>, vector<8x128xf32>, vector<8x128xf32>, vector<8x128xf32>, vector<8x128xf32>, vector<8x128xf32>, vector<8x128xf32> -> vector<64x128xf32>
    %cst_6 = arith.constant 0.000000e+00 : f32
    %23 = vector.broadcast %cst_6 : f32 to vector<16x128xf32>
    %24 = vector.extract_strided_slice %22 {offsets = [0, 0], sizes = [48, 128], strides = [1, 1]} : vector<64x128xf32> to vector<48x128xf32>
    %25 = tpu.concatenate %23, %24 in 0 : vector<16x128xf32>, vector<48x128xf32> -> vector<64x128xf32>
    %cst_7 = arith.constant 0.000000e+00 : f32
    %26 = vector.broadcast %cst_7 : f32 to vector<8x128xf32>
    %27 = vector.extract_strided_slice %22 {offsets = [0, 0], sizes = [56, 128], strides = [1, 1]} : vector<64x128xf32> to vector<56x128xf32>
    %28 = tpu.concatenate %26, %27 in 0 : vector<8x128xf32>, vector<56x128xf32> -> vector<64x128xf32>
    %cst_8 = arith.constant 0.000000e+00 : f32
    %29 = vector.broadcast %cst_8 : f32 to vector<8x128xf32>
    %30 = vector.extract_strided_slice %22 {offsets = [8, 0], sizes = [56, 128], strides = [1, 1]} : vector<64x128xf32> to vector<56x128xf32>
    %31 = tpu.concatenate %30, %29 in 0 : vector<56x128xf32>, vector<8x128xf32> -> vector<64x128xf32>
    %cst_9 = arith.constant 0.000000e+00 : f32
    %32 = vector.broadcast %cst_9 : f32 to vector<16x128xf32>
    %33 = vector.extract_strided_slice %22 {offsets = [16, 0], sizes = [48, 128], strides = [1, 1]} : vector<64x128xf32> to vector<48x128xf32>
    %34 = tpu.concatenate %33, %32 in 0 : vector<48x128xf32>, vector<16x128xf32> -> vector<64x128xf32>
    %35 = tpu.concatenate %25, %28, %22, %31, %34 in 1 : vector<64x128xf32>, vector<64x128xf32>, vector<64x128xf32>, vector<64x128xf32>, vector<64x128xf32> -> vector<64x640xf32>
    %36 = arith.truncf %35 : vector<64x640xf32> to vector<64x640xbf16>
    %c0_10 = arith.constant 0 : index
    %c0_11 = arith.constant 0 : index
    %37 = vector.load %arg4[%c0_10, %c0_11] : memref<640x128xbf16, #tpu.memory_space<vmem>>, vector<640x128xbf16>
    %cst_12 = arith.constant dense<0.000000e+00> : vector<64x128xf32>
    %38 = tpu.matmul %36, %37, %cst_12 {dimension_numbers = #tpu.dot_dimension_numbers<[1], [0], [0], [1], [0, 0, 1, 1], [], []>} : vector<64x640xbf16>, vector<640x128xbf16>, vector<64x128xf32> -> vector<64x128xf32>
    %c0_13 = arith.constant 0 : index
    %c0_14 = arith.constant 0 : index
    %39 = vector.load %arg5[%c0_13, %c0_14] : memref<1x128xf32, #tpu.memory_space<vmem>>, vector<1x128xf32>
    %40 = vector.broadcast %39 : vector<1x128xf32> to vector<64x128xf32>
    %41 = arith.addf %38, %40 : vector<64x128xf32>
    %cst_15 = arith.constant 0.000000e+00 : f32
    %42 = vector.broadcast %cst_15 : f32 to vector<8x128xf32>
    %43 = vector.extract_strided_slice %41 {offsets = [8, 0], sizes = [56, 128], strides = [1, 1]} : vector<64x128xf32> to vector<56x128xf32>
    %44 = tpu.concatenate %43, %42 in 0 : vector<56x128xf32>, vector<8x128xf32> -> vector<64x128xf32>
    %45 = arith.maximumf %41, %44 : vector<64x128xf32>
    %46 = vector.extract_strided_slice %45 {offsets = [0, 0], sizes = [8, 128], strides = [1, 1]} : vector<64x128xf32> to vector<8x128xf32>
    %47 = vector.extract_strided_slice %45 {offsets = [16, 0], sizes = [8, 128], strides = [1, 1]} : vector<64x128xf32> to vector<8x128xf32>
    %48 = vector.extract_strided_slice %45 {offsets = [32, 0], sizes = [8, 128], strides = [1, 1]} : vector<64x128xf32> to vector<8x128xf32>
    %49 = vector.extract_strided_slice %45 {offsets = [48, 0], sizes = [8, 128], strides = [1, 1]} : vector<64x128xf32> to vector<8x128xf32>
    %50 = tpu.concatenate %46, %47, %48, %49 in 0 : vector<8x128xf32>, vector<8x128xf32>, vector<8x128xf32>, vector<8x128xf32> -> vector<32x128xf32>
    %51 = vector.extract_strided_slice %50 {offsets = [0, 0], sizes = [8, 128], strides = [1, 1]} : vector<32x128xf32> to vector<8x128xf32>
    %52 = vector.extract_strided_slice %50 {offsets = [8, 0], sizes = [8, 128], strides = [1, 1]} : vector<32x128xf32> to vector<8x128xf32>
    %53 = vector.extract_strided_slice %50 {offsets = [16, 0], sizes = [8, 128], strides = [1, 1]} : vector<32x128xf32> to vector<8x128xf32>
    %54 = vector.extract_strided_slice %50 {offsets = [24, 0], sizes = [8, 128], strides = [1, 1]} : vector<32x128xf32> to vector<8x128xf32>
    %55 = tpu.concatenate %51, %52, %53, %54 in 1 : vector<8x128xf32>, vector<8x128xf32>, vector<8x128xf32>, vector<8x128xf32> -> vector<8x512xf32>
    %c0_i32_16 = arith.constant 0 : i32
    %56 = tpu.memref_slice %arg14[%c0_i32_16] : memref<2x!tpu.dma_semaphore, #tpu.memory_space<semaphore_mem>> -> memref<1x!tpu.dma_semaphore, #tpu.memory_space<semaphore_mem>>
    %57 = tpu.memref_squeeze %56 : memref<1x!tpu.dma_semaphore, #tpu.memory_space<semaphore_mem>> -> memref<!tpu.dma_semaphore, #tpu.memory_space<semaphore_mem>>
    tpu.wait_dma2 semaphore(%57 : memref<!tpu.dma_semaphore, #tpu.memory_space<semaphore_mem>>) src(%arg6 : memref<512x512xbf16, #tpu.memory_space<any>>) dst(%arg12 : memref<512x512xbf16, #tpu.memory_space<vmem>>)
    %58 = arith.truncf %55 : vector<8x512xf32> to vector<8x512xbf16>
    %c0_17 = arith.constant 0 : index
    %c0_18 = arith.constant 0 : index
    %59 = vector.load %arg12[%c0_17, %c0_18] : memref<512x512xbf16, #tpu.memory_space<vmem>>, vector<512x512xbf16>
    %cst_19 = arith.constant dense<0.000000e+00> : vector<8x512xf32>
    %60 = tpu.matmul %58, %59, %cst_19 {dimension_numbers = #tpu.dot_dimension_numbers<[1], [0], [0], [1], [0, 0, 1, 1], [], []>} : vector<8x512xbf16>, vector<512x512xbf16>, vector<8x512xf32> -> vector<8x512xf32>
    %c0_20 = arith.constant 0 : index
    %c0_21 = arith.constant 0 : index
    %61 = vector.load %arg7[%c0_20, %c0_21] : memref<1x512xf32, #tpu.memory_space<vmem>>, vector<1x512xf32>
    %62 = vector.broadcast %61 : vector<1x512xf32> to vector<8x512xf32>
    %63 = arith.addf %60, %62 : vector<8x512xf32>
    %cst_22 = arith.constant 0.000000e+00 : f32
    %64 = vector.broadcast %cst_22 : f32 to vector<8x512xf32>
    %65 = arith.maximumf %63, %64 : vector<8x512xf32>
    %c1_i32_23 = arith.constant 1 : i32
    %66 = tpu.memref_slice %arg14[%c1_i32_23] : memref<2x!tpu.dma_semaphore, #tpu.memory_space<semaphore_mem>> -> memref<1x!tpu.dma_semaphore, #tpu.memory_space<semaphore_mem>>
    %67 = tpu.memref_squeeze %66 : memref<1x!tpu.dma_semaphore, #tpu.memory_space<semaphore_mem>> -> memref<!tpu.dma_semaphore, #tpu.memory_space<semaphore_mem>>
    tpu.wait_dma2 semaphore(%67 : memref<!tpu.dma_semaphore, #tpu.memory_space<semaphore_mem>>) src(%arg8 : memref<512x128xbf16, #tpu.memory_space<any>>) dst(%arg13 : memref<512x128xbf16, #tpu.memory_space<vmem>>)
    %68 = arith.truncf %65 : vector<8x512xf32> to vector<8x512xbf16>
    %c0_24 = arith.constant 0 : index
    %c0_25 = arith.constant 0 : index
    %69 = vector.load %arg13[%c0_24, %c0_25] : memref<512x128xbf16, #tpu.memory_space<vmem>>, vector<512x128xbf16>
    %cst_26 = arith.constant dense<0.000000e+00> : vector<8x128xf32>
    %70 = tpu.matmul %68, %69, %cst_26 {dimension_numbers = #tpu.dot_dimension_numbers<[1], [0], [0], [1], [0, 0, 1, 1], [], []>} : vector<8x512xbf16>, vector<512x128xbf16>, vector<8x128xf32> -> vector<8x128xf32>
    %c0_27 = arith.constant 0 : index
    %c0_28 = arith.constant 0 : index
    %71 = vector.load %arg1[%c0_27, %c0_28] : memref<8x1xf32, #tpu.memory_space<vmem>>, vector<8x1xf32>
    %c0_29 = arith.constant 0 : index
    %c0_30 = arith.constant 0 : index
    %72 = vector.load %arg9[%c0_29, %c0_30] : memref<1x128xf32, #tpu.memory_space<vmem>>, vector<1x128xf32>
    %73 = vector.broadcast %71 : vector<8x1xf32> to vector<8x128xf32>
    %74 = vector.broadcast %72 : vector<1x128xf32> to vector<8x128xf32>
    %75 = arith.mulf %73, %74 : vector<8x128xf32>
    %76 = arith.addf %70, %75 : vector<8x128xf32>
    %c0_31 = arith.constant 0 : index
    %c0_32 = arith.constant 0 : index
    %77 = vector.load %arg10[%c0_31, %c0_32] : memref<1x128xf32, #tpu.memory_space<vmem>>, vector<1x128xf32>
    %78 = vector.broadcast %77 : vector<1x128xf32> to vector<8x128xf32>
    %79 = arith.addf %76, %78 : vector<8x128xf32>
    %80 = tpu.iota {dimensions = array<i32: 1>} : vector<8x128xi32>
    %c2_i32 = arith.constant 2 : i32
    %81 = vector.broadcast %c2_i32 : i32 to vector<8x128xi32>
    %82 = arith.cmpi sge, %80, %81 : vector<8x128xi32>
    %c5_i32 = arith.constant 5 : i32
    %83 = vector.broadcast %c5_i32 : i32 to vector<8x128xi32>
    %84 = arith.cmpi slt, %80, %83 : vector<8x128xi32>
    %85 = arith.andi %82, %84 : vector<8x128xi1>
    %86 = math.absf %79 : vector<8x128xf32>
    %87 = arith.select %85, %86, %79 : vector<8x128xi1>, vector<8x128xf32>
    %c0_33 = arith.constant 0 : index
    %c0_34 = arith.constant 0 : index
    %88 = vector.load %arg11[%c0_33, %c0_34] : memref<8x128xf32, #tpu.memory_space<vmem>>, vector<8x128xf32>
    tpu.vector_store %arg11[%c0_33, %c0_34], %87 {strides = array<i32>} : memref<8x128xf32, #tpu.memory_space<vmem>>, vector<8x128xf32>,
    return
  }
}

</mosaic_0001>

<llo_original>
// kernel: lenet_forward.1
$region0: #{lenet_forward.1}
  #allocation0 [shape = 'u32[]', space=smem, size = 0x4, offset = 0x4, fixed_abs, tag = 'smem constant byte address 0x4 - core index']
  #allocation1 [shape = 'u32[144,128]{1,0:T(1,128)}', space=vmem, size = 0x12000, scoped, tag = 'internal scratch']
  #allocation2 [shape = 'bf16[512,512]{1,0:T(16,128)(2,1)}', space=vmem, size = 0x80000, scoped, tag = 'scratch operand']
  #allocation3 [shape = 'bf16[512,128]{1,0:T(16,128)(2,1)}', space=vmem, size = 0x20000, scoped, tag = 'scratch operand']
  #allocation4 [shape = 's32[2]{0}', space=sflag, size = 0x8, scoped, tag = 'scratch operand']
  #allocation5 [shape = 's32[]', space=sflag, size = 0x4, offset = 0, fixed_abs, tag = 'sflag constant byte address 0x0 - dummy sync flag']
  #allocation7 [shape = 's32[]', space=sflag, size = 0x4, offset = 0, fixed_abs, tag = 'sflag constant byte address 0x0 - dummy sync flag']
  #allocation8 [shape = 's32[]', space=sflag, size = 0x4, offset = 0, fixed_abs, tag = 'sflag constant byte address 0x0 - dummy sync flag']
  #allocation9 [shape = 'u32[]', space=smem, size = 0x4, offset = 0x44, fixed_abs, tag = 'smem constant byte address 0x44 - assertion arg 0']
  #allocation10 [shape = 'u32[]', space=smem, size = 0x4, offset = 0x48, fixed_abs, tag = 'smem constant byte address 0x48 - assertion arg 1']
  %s0 = inlined_call_operand.vmem [shape: f32[128,8], index: 0, kind: input, shape index: {}]
  %s1 = inlined_call_operand.vmem [shape: f32[8,1], index: 1, kind: input, shape index: {}]
  %s2 = inlined_call_operand.vmem [shape: f32[8,128], index: 2, kind: input, shape index: {}]
  %s3 = inlined_call_operand.vmem [shape: f32[1,128], index: 3, kind: input, shape index: {}]
  %s4 = inlined_call_operand.vmem [shape: bf16[640,128], index: 4, kind: input, shape index: {}]
  %s5 = inlined_call_operand.vmem [shape: f32[1,128], index: 5, kind: input, shape index: {}]
  %s6 = inlined_call_operand.hbm [shape: bf16[512,512], index: 6, kind: input, shape index: {}]
  %s7 = inlined_call_operand.vmem [shape: f32[1,512], index: 7, kind: input, shape index: {}]
  %s8 = inlined_call_operand.hbm [shape: bf16[512,128], index: 8, kind: input, shape index: {}]
  %s9 = inlined_call_operand.vmem [shape: f32[1,128], index: 9, kind: input, shape index: {}]
  %s10 = inlined_call_operand.vmem [shape: f32[1,128], index: 10, kind: input, shape index: {}]
  %s11 = inlined_call_operand.vmem [shape: f32[8,128], index: 11, kind: output, shape index: {}]
  %s12 = sld [smem:[#allocation0]]
  $region50: #{lenet_forward.1} parent=0
    _
  %s14 = ssub.s32 1, %s12
  %s15 = scalar_select 0, %s14, %s12
  $region1: #{lenet_forward.1} parent=0
    #allocation6 [shape = 'u32[9]{0}', space=smem, size = 0x24, scoped, tag = 'DMA stride descriptor']
    // Predicated region
    $region2: #{lenet_forward.1} parent=1 // pred_check
      _
    $region3: #{lenet_forward.1} parent=1 // pred_check_branch
      %17 = sbr.rel (0) target = $region5
    $region4: #{lenet_forward.1} parent=1 // pred_region
      _
    $region5: #{lenet_forward.1} parent=1 // pred_fallthru
      _
    // Predicated region
    $region6: #{lenet_forward.1} parent=1 // pred_check
      _
    $region7: #{lenet_forward.1} parent=1 // pred_check_branch
      %19 = sbr.rel (0) target = $region9
    $region8: #{lenet_forward.1} parent=1 // pred_region
      _
    $region9: #{lenet_forward.1} parent=1 // pred_fallthru
      _
    // Predicated region
    $region10: #{lenet_forward.1} parent=1 // pred_check
      _
    $region11: #{lenet_forward.1} parent=1 // pred_check_branch
      %21 = sbr.rel (0) target = $region13
    $region12: #{lenet_forward.1} parent=1 // pred_region
      _
    $region13: #{lenet_forward.1} parent=1 // pred_fallthru
      _
    // Predicated region
    $region14: #{lenet_forward.1} parent=1 // pred_check
      _
    $region15: #{lenet_forward.1} parent=1 // pred_check_branch
      %23 = sbr.rel (0) target = $region17
    $region16: #{lenet_forward.1} parent=1 // pred_region
      _
    $region17: #{lenet_forward.1} parent=1 // pred_fallthru
      _
    // Predicated region
    $region18: #{lenet_forward.1} parent=1 // pred_check
      _
    $region19: #{lenet_forward.1} parent=1 // pred_check_branch
      %25 = sbr.rel (0) target = $region21
    $region20: #{lenet_forward.1} parent=1 // pred_region
      _
    $region21: #{lenet_forward.1} parent=1 // pred_fallthru
      _
    // Predicated region
    $region22: #{lenet_forward.1} parent=1 // pred_check
      _
    $region23: #{lenet_forward.1} parent=1 // pred_check_branch
      %27 = sbr.rel (0) target = $region25
    $region24: #{lenet_forward.1} parent=1 // pred_region
      _
    $region25: #{lenet_forward.1} parent=1 // pred_fallthru
      _
    // Predicated region
    $region26: #{lenet_forward.1} parent=1 // pred_check
      _
    $region27: #{lenet_forward.1} parent=1 // pred_check_branch
      %29 = sbr.rel (0) target = $region29
    $region28: #{lenet_forward.1} parent=1 // pred_region
      _
    $region29: #{lenet_forward.1} parent=1 // pred_fallthru
      _
    // Predicated region
    $region30: #{lenet_forward.1} parent=1 // pred_check
      _
    $region31: #{lenet_forward.1} parent=1 // pred_check_branch
      %31 = sbr.rel (0) target = $region33
    $region32: #{lenet_forward.1} parent=1 // pred_region
      _
    $region33: #{lenet_forward.1} parent=1 // pred_fallthru
      _
    // Predicated region
    $region34: #{lenet_forward.1} parent=1 // pred_check
      _
    $region35: #{lenet_forward.1} parent=1 // pred_check_branch
      %33 = sbr.rel (0) target = $region37
    $region36: #{lenet_forward.1} parent=1 // pred_region
      _
    $region37: #{lenet_forward.1} parent=1 // pred_fallthru
      _
    %s36 = sshll.u32 1, 14
    %s37 = sxor.u32 4294967295, %s36
    %s39 = sld [smem:[#allocation0]]
    %s40 = sadd.s32 2, %s39
    %s42 = sshll.u32 7, 26
    %s43 = sxor.u32 4294967295, %s42
    %s44 = sand.u32 0, %s43
    %s45 = sshll.u32 %s40, 26
    %s46 = sor.u32 %s44, %s45
    %s47 = sshll.u32 [#allocation2], 4
    %s48 = int_to_ptr.vmem [resolvable:$true] %s47
    %51 = sst [smem:[#allocation6]] 512
    %s52 = scalar_lea.smem [#allocation6], 1
    %53 = sst [smem:[%s52]] 512
    %s54 = scalar_lea.smem [#allocation6], 2
    %55 = sst [smem:[%s54]] 4
    %s56 = scalar_lea.smem [#allocation6], 3
    %57 = sst [smem:[%s56]] 64
    %s58 = scalar_lea.smem [#allocation6], 4
    %59 = sst [smem:[%s58]] 128
    %s60 = scalar_lea.smem [#allocation6], 5
    %61 = sst [smem:[%s60]] 2
    %s62 = scalar_lea.smem [#allocation6], 6
    %63 = sst [smem:[%s62]] 256
    %s64 = scalar_lea.smem [#allocation6], 7
    %65 = sst [smem:[%s64]] 64
    %s66 = scalar_lea.smem [#allocation6], 8
    %67 = sst [smem:[%s66]] 4
    %69 = dma.general %s6, 16384, %s48, [#allocation4], [#allocation5], [#allocation6], %s46, 0
    %s70 = scalar_lea.sflag [#allocation4], 1
    // Predicated region
    $region38: #{lenet_forward.1} parent=1 // pred_check
      _
    $region39: #{lenet_forward.1} parent=1 // pred_check_branch
      %72 = sbr.rel target = $region41
    $region40: #{lenet_forward.1} parent=1 // pred_region
      %73 = sst [smem:[#allocation9]] [#allocation8]
      %74 = sst [smem:[#allocation10]] [#allocation7]
    $region41: #{lenet_forward.1} parent=1 // pred_fallthru
      _
    %76 = shalt.err (0)
    %s78 = sshll.u32 [#allocation3], 4
    %s79 = int_to_ptr.vmem [resolvable:$true] %s78
    %81 = dma.hbm_to_vmem [thread:$0]  %s8, 4096, %s79, %s70
    %v82 = vld [vmem:[%s0] sm:$0xff]
    %v83 = vld [vmem:[%s0 + $0x8] sm:$0xff]
    %v84 = vld [vmem:[%s0 + $0x10] sm:$0xff]
    %v85 = vld [vmem:[%s0 + $0x18] sm:$0xff]
    %v86 = vld [vmem:[%s0 + $0x20] sm:$0xff]
    %v87 = vld [vmem:[%s0 + $0x28] sm:$0xff]
    %v88 = vld [vmem:[%s0 + $0x30] sm:$0xff]
    %v89 = vld [vmem:[%s0 + $0x38] sm:$0xff]
    %v90 = vld [vmem:[%s0 + $0x40] sm:$0xff]
    %v91 = vld [vmem:[%s0 + $0x48] sm:$0xff]
    %v92 = vld [vmem:[%s0 + $0x50] sm:$0xff]
    %v93 = vld [vmem:[%s0 + $0x58] sm:$0xff]
    %v94 = vld [vmem:[%s0 + $0x60] sm:$0xff]
    %v95 = vld [vmem:[%s0 + $0x68] sm:$0xff]
    %v96 = vld [vmem:[%s0 + $0x70] sm:$0xff]
    %v97 = vld [vmem:[%s0 + $0x78] sm:$0xff]
    %v98 = vld [vmem:[%s2] sm:$0xff]
    %v99 = vld [vmem:[%s3] sm:$0x1]
    %v101 = vlaneseq
    %v102 = vshrl.u32 %v101, 7
    %v103 = vsub.s32 0, %v102
    %v104 = vrot.slane %v99, %v103
    %vm106 = vcmask 64512
    %v108 = vsel %vm106, %v82, 0
    %v111 = vsel %vm106, %v83, 0
    %v114 = vsel %vm106, %v84, 0
    %v117 = vsel %vm106, %v85, 0
    %v120 = vsel %vm106, %v86, 0
    %v123 = vsel %vm106, %v87, 0
    %v126 = vsel %vm106, %v88, 0
    %v129 = vsel %vm106, %v89, 0
    %v132 = vsel %vm106, %v90, 0
    %v135 = vsel %vm106, %v91, 0
    %v138 = vsel %vm106, %v92, 0
    %v141 = vsel %vm106, %v93, 0
    %v144 = vsel %vm106, %v94, 0
    %v147 = vsel %vm106, %v95, 0
    %v150 = vsel %vm106, %v96, 0
    %v153 = vsel %vm106, %v97, 0
    %155 = vmatprep.subr.mxu0 0.0
    %156 = vmatpush1.msra.mxu0 %v98
    %157 = vmatprep.subr.mxu0 0.0
    %158 = vmatpush1.msra.mxu0 0.0
    %159 = vmatprep.subr.mxu0 0.0
    %160 = vmatpush1.msra.mxu0 0.0
    %161 = vmatprep.subr.mxu0 0.0
    %162 = vmatpush1.msra.mxu0 0.0
    %163 = vmatprep.subr.mxu0 0.0
    %164 = vmatpush1.msra.mxu0 0.0
    %165 = vmatprep.subr.mxu0 0.0
    %166 = vmatpush1.msra.mxu0 0.0
    %167 = vmatprep.subr.mxu0 0.0
    %168 = vmatpush1.msra.mxu0 0.0
    %169 = vmatprep.subr.mxu0 0.0
    %170 = vmatpush1.msra.mxu0 0.0
    %171 = vmatprep.subr.mxu0 0.0
    %172 = vmatpush1.msra.mxu0 0.0
    %173 = vmatprep.subr.mxu0 0.0
    %174 = vmatpush1.msra.mxu0 0.0
    %175 = vmatprep.subr.mxu0 0.0
    %176 = vmatpush1.msra.mxu0 0.0
    %177 = vmatprep.subr.mxu0 0.0
    %178 = vmatpush1.msra.mxu0 0.0
    %179 = vmatprep.subr.mxu0 0.0
    %180 = vmatpush1.msra.mxu0 0.0
    %181 = vmatprep.subr.mxu0 0.0
    %182 = vmatpush1.msra.mxu0 0.0
    %183 = vmatprep.subr.mxu0 0.0
    %184 = vmatpush1.msra.mxu0 0.0
    %185 = vmatprep.subr.mxu0 0.0
    %186 = vmatpush1.msra.mxu0 0.0
    %187 = vmatprep.subr.mxu0 0.0
    %188 = vmatpush1.msra.mxu0 0.0
    %189 = vmatprep.subr.mxu0 0.0
    %190 = vmatpush1.msra.mxu0 0.0
    %191 = vmatprep.subr.mxu0 0.0
    %192 = vmatpush1.msra.mxu0 0.0
    %193 = vmatprep.subr.mxu0 0.0
    %194 = vmatpush1.msra.mxu0 0.0
    %195 = vmatprep.subr.mxu0 0.0
    %196 = vmatpush1.msra.mxu0 0.0
    %197 = vmatprep.subr.mxu0 0.0
    %198 = vmatpush1.msra.mxu0 0.0
    %199 = vmatprep.subr.mxu0 0.0
    %200 = vmatpush1.msra.mxu0 0.0
    %201 = vmatprep.subr.mxu0 0.0
    %202 = vmatpush1.msra.mxu0 0.0
    %203 = vmatprep.subr.mxu0 0.0
    %204 = vmatpush1.msra.mxu0 0.0
    %205 = vmatprep.subr.mxu0 0.0
    %206 = vmatpush1.msra.mxu0 0.0
    %207 = vmatprep.subr.mxu0 0.0
    %208 = vmatpush1.msra.mxu0 0.0
    %209 = vmatprep.subr.mxu0 0.0
    %210 = vmatpush1.msra.mxu0 0.0
    %211 = vmatprep.subr.mxu0 0.0
    %212 = vmatpush1.msra.mxu0 0.0
    %213 = vmatprep.subr.mxu0 0.0
    %214 = vmatpush1.msra.mxu0 0.0
    %215 = vmatprep.subr.mxu0 0.0
    %216 = vmatpush1.msra.mxu0 0.0
    %217 = vmatprep.subr.mxu0 0.0
    %218 = vmatpush1.msra.mxu0 0.0
    %219 = vmatprep.mubr.f32.mxu0 0.0
    %220 = vmatmul.mubr.f32.gmra.mrb[0].mxu0 %v108
    %v221 = vpop.f32.mrb[0].mxu0
    %v222 = vadd.f32 %v104, %v221
    %v223 = vpop.f32.mrb[0].mxu0
    %224 = vmatprep.mubr.f32.mxu0 0.0
    %225 = vmatmul.mubr.f32.gmra.mrb[0].mxu0 %v111
    %v226 = vpop.f32.mrb[0].mxu0
    %v227 = vadd.f32 %v104, %v226
    %v228 = vpop.f32.mrb[0].mxu0
    %229 = vmatprep.mubr.f32.mxu0 0.0
    %230 = vmatmul.mubr.f32.gmra.mrb[0].mxu0 %v114
    %v231 = vpop.f32.mrb[0].mxu0
    %v232 = vadd.f32 %v104, %v231
    %v233 = vpop.f32.mrb[0].mxu0
    %234 = vmatprep.mubr.f32.mxu0 0.0
    %235 = vmatmul.mubr.f32.gmra.mrb[0].mxu0 %v117
    %v236 = vpop.f32.mrb[0].mxu0
    %v237 = vadd.f32 %v104, %v236
    %v238 = vpop.f32.mrb[0].mxu0
    %239 = vmatprep.mubr.f32.mxu0 0.0
    %240 = vmatmul.mubr.f32.gmra.mrb[0].mxu0 %v120
    %v241 = vpop.f32.mrb[0].mxu0
    %v242 = vadd.f32 %v104, %v241
    %v243 = vpop.f32.mrb[0].mxu0
    %244 = vmatprep.mubr.f32.mxu0 0.0
    %245 = vmatmul.mubr.f32.gmra.mrb[0].mxu0 %v123
    %v246 = vpop.f32.mrb[0].mxu0
    %v247 = vadd.f32 %v104, %v246
    %v248 = vpop.f32.mrb[0].mxu0
    %249 = vmatprep.mubr.f32.mxu0 0.0
    %250 = vmatmul.mubr.f32.gmra.mrb[0].mxu0 %v126
    %v251 = vpop.f32.mrb[0].mxu0
    %v252 = vadd.f32 %v104, %v251
    %v253 = vpop.f32.mrb[0].mxu0
    %254 = vmatprep.mubr.f32.mxu0 0.0
    %255 = vmatmul.mubr.f32.gmra.mrb[0].mxu0 %v129
    %v256 = vpop.f32.mrb[0].mxu0
    %v257 = vadd.f32 %v104, %v256
    %v258 = vpop.f32.mrb[0].mxu0
    %259 = vmatprep.mubr.f32.mxu0 0.0
    %260 = vmatmul.mubr.f32.gmra.mrb[0].mxu0 %v132
    %v261 = vpop.f32.mrb[0].mxu0
    %v262 = vadd.f32 %v104, %v261
    %v263 = vpop.f32.mrb[0].mxu0
    %264 = vmatprep.mubr.f32.mxu0 0.0
    %265 = vmatmul.mubr.f32.gmra.mrb[0].mxu0 %v135
    %v266 = vpop.f32.mrb[0].mxu0
    %v267 = vadd.f32 %v104, %v266
    %v268 = vpop.f32.mrb[0].mxu0
    %269 = vmatprep.mubr.f32.mxu0 0.0
    %270 = vmatmul.mubr.f32.gmra.mrb[0].mxu0 %v138
    %v271 = vpop.f32.mrb[0].mxu0
    %v272 = vadd.f32 %v104, %v271
    %v273 = vpop.f32.mrb[0].mxu0
    %274 = vmatprep.mubr.f32.mxu0 0.0
    %275 = vmatmul.mubr.f32.gmra.mrb[0].mxu0 %v141
    %v276 = vpop.f32.mrb[0].mxu0
    %v277 = vadd.f32 %v104, %v276
    %v278 = vpop.f32.mrb[0].mxu0
    %279 = vmatprep.mubr.f32.mxu0 0.0
    %280 = vmatmul.mubr.f32.gmra.mrb[0].mxu0 %v144
    %v281 = vpop.f32.mrb[0].mxu0
    %v282 = vadd.f32 %v104, %v281
    %v283 = vpop.f32.mrb[0].mxu0
    %284 = vmatprep.mubr.f32.mxu0 0.0
    %285 = vmatmul.mubr.f32.gmra.mrb[0].mxu0 %v147
    %v286 = vpop.f32.mrb[0].mxu0
    %v287 = vadd.f32 %v104, %v286
    %v288 = vpop.f32.mrb[0].mxu0
    %289 = vmatprep.mubr.f32.mxu0 0.0
    %290 = vmatmul.mubr.f32.gmra.mrb[0].mxu0 %v150
    %v291 = vpop.f32.mrb[0].mxu0
    %v292 = vadd.f32 %v104, %v291
    %v293 = vpop.f32.mrb[0].mxu0
    %294 = vmatprep.mubr.f32.mxu0 0.0
    %295 = vmatmul.mubr.f32.gmra.mrb[0].mxu0 %v153
    %v296 = vpop.f32.mrb[0].mxu0
    %v297 = vadd.f32 %v104, %v296
    %v298 = vpop.f32.mrb[0].mxu0
    %299 = vdwg.mxu0
    %v300 = vmax.f32 %v222, %v227
    %v301 = vmax.f32 %v232, %v237
    %v302 = vmax.f32 %v242, %v247
    %v303 = vmax.f32 %v252, %v257
    %v304 = vmax.f32 %v262, %v267
    %v305 = vmax.f32 %v272, %v277
    %v306 = vmax.f32 %v282, %v287
    %v307 = vmax.f32 %v292, %v297
    %v308 = vpack.c.bf16 0.0, 0.0
    %v309 = vpack.c.bf16 %v300, 0.0
    %v310 = vpack.c.bf16 %v301, %v300
    %v311 = vpack.c.bf16 %v302, %v301
    %v312 = vpack.c.bf16 %v303, %v302
    %v313 = vpack.c.bf16 %v304, %v303
    %v314 = vpack.c.bf16 %v305, %v304
    %v315 = vpack.c.bf16 %v306, %v305
    %v316 = vpack.c.bf16 %v307, %v306
    %v317 = vpack.c.bf16 0.0, %v307
    %v318 = vld [vmem:[%s4] sm:$0xf]
    %v319 = vld [vmem:[%s4 + $0x4] sm:$0xf]
    %v320 = vld [vmem:[%s4 + $0x8] sm:$0xf]
    %v321 = vld [vmem:[%s4 + $0xc] sm:$0xf]
    %v322 = vld [vmem:[%s4 + $0x10] sm:$0xf]
    %v323 = vld [vmem:[%s4 + $0x14] sm:$0xf]
    %v324 = vld [vmem:[%s4 + $0x18] sm:$0xf]
    %v325 = vld [vmem:[%s4 + $0x1c] sm:$0xf]
    %v326 = vld [vmem:[%s4 + $0x20] sm:$0xf]
    %v327 = vld [vmem:[%s4 + $0x24] sm:$0xf]
    %v328 = vld [vmem:[%s4 + $0x28] sm:$0xf]
    %v329 = vld [vmem:[%s4 + $0x2c] sm:$0xf]
    %v330 = vld [vmem:[%s4 + $0x30] sm:$0xf]
    %v331 = vld [vmem:[%s4 + $0x34] sm:$0xf]
    %v332 = vld [vmem:[%s4 + $0x38] sm:$0xf]
    %v333 = vld [vmem:[%s4 + $0x3c] sm:$0xf]
    %v334 = vld [vmem:[%s4 + $0x40] sm:$0xf]
    %v335 = vld [vmem:[%s4 + $0x44] sm:$0xf]
    %v336 = vld [vmem:[%s4 + $0x48] sm:$0xf]
    %v337 = vld [vmem:[%s4 + $0x4c] sm:$0xf]
    %v338 = vld [vmem:[%s4 + $0x50] sm:$0xf]
    %v339 = vld [vmem:[%s4 + $0x54] sm:$0xf]
    %v340 = vld [vmem:[%s4 + $0x58] sm:$0xf]
    %v341 = vld [vmem:[%s4 + $0x5c] sm:$0xf]
    %v342 = vld [vmem:[%s4 + $0x60] sm:$0xf]
    %v343 = vld [vmem:[%s4 + $0x64] sm:$0xf]
    %v344 = vld [vmem:[%s4 + $0x68] sm:$0xf]
    %v345 = vld [vmem:[%s4 + $0x6c] sm:$0xf]
    %v346 = vld [vmem:[%s4 + $0x70] sm:$0xf]
    %v347 = vld [vmem:[%s4 + $0x74] sm:$0xf]
    %v348 = vld [vmem:[%s4 + $0x78] sm:$0xf]
    %v349 = vld [vmem:[%s4 + $0x7c] sm:$0xf]
    %v350 = vld [vmem:[%s4 + $0x80] sm:$0xf]
    %v351 = vld [vmem:[%s4 + $0x84] sm:$0xf]
    %v352 = vld [vmem:[%s4 + $0x88] sm:$0xf]
    %v353 = vld [vmem:[%s4 + $0x8c] sm:$0xf]
    %v354 = vld [vmem:[%s4 + $0x90] sm:$0xf]
    %v355 = vld [vmem:[%s4 + $0x94] sm:$0xf]
    %v356 = vld [vmem:[%s4 + $0x98] sm:$0xf]
    %v357 = vld [vmem:[%s4 + $0x9c] sm:$0xf]
    %v358 = vld [vmem:[%s4 + $0xa0] sm:$0xf]
    %v359 = vld [vmem:[%s4 + $0xa4] sm:$0xf]
    %v360 = vld [vmem:[%s4 + $0xa8] sm:$0xf]
    %v361 = vld [vmem:[%s4 + $0xac] sm:$0xf]
    %v362 = vld [vmem:[%s4 + $0xb0] sm:$0xf]
    %v363 = vld [vmem:[%s4 + $0xb4] sm:$0xf]
    %v364 = vld [vmem:[%s4 + $0xb8] sm:$0xf]
    %v365 = vld [vmem:[%s4 + $0xbc] sm:$0xf]
    %v366 = vld [vmem:[%s4 + $0xc0] sm:$0xf]
    %v367 = vld [vmem:[%s4 + $0xc4] sm:$0xf]
    %v368 = vld [vmem:[%s4 + $0xc8] sm:$0xf]
    %v369 = vld [vmem:[%s4 + $0xcc] sm:$0xf]
    %v370 = vld [vmem:[%s4 + $0xd0] sm:$0xf]
    %v371 = vld [vmem:[%s4 + $0xd4] sm:$0xf]
    %v372 = vld [vmem:[%s4 + $0xd8] sm:$0xf]
    %v373 = vld [vmem:[%s4 + $0xdc] sm:$0xf]
    %v374 = vld [vmem:[%s4 + $0xe0] sm:$0xf]
    %v375 = vld [vmem:[%s4 + $0xe4] sm:$0xf]
    %v376 = vld [vmem:[%s4 + $0xe8] sm:$0xf]
    %v377 = vld [vmem:[%s4 + $0xec] sm:$0xf]
    %v378 = vld [vmem:[%s4 + $0xf0] sm:$0xf]
    %v379 = vld [vmem:[%s4 + $0xf4] sm:$0xf]
    %v380 = vld [vmem:[%s4 + $0xf8] sm:$0xf]
    %v381 = vld [vmem:[%s4 + $0xfc] sm:$0xf]
    %v382 = vld [vmem:[%s4 + $0x100] sm:$0xf]
    %v383 = vld [vmem:[%s4 + $0x104] sm:$0xf]
    %v384 = vld [vmem:[%s4 + $0x108] sm:$0xf]
    %v385 = vld [vmem:[%s4 + $0x10c] sm:$0xf]
    %v386 = vld [vmem:[%s4 + $0x110] sm:$0xf]
    %v387 = vld [vmem:[%s4 + $0x114] sm:$0xf]
    %v388 = vld [vmem:[%s4 + $0x118] sm:$0xf]
    %v389 = vld [vmem:[%s4 + $0x11c] sm:$0xf]
    %v390 = vld [vmem:[%s4 + $0x120] sm:$0xf]
    %v391 = vld [vmem:[%s4 + $0x124] sm:$0xf]
    %v392 = vld [vmem:[%s4 + $0x128] sm:$0xf]
    %v393 = vld [vmem:[%s4 + $0x12c] sm:$0xf]
    %v394 = vld [vmem:[%s4 + $0x130] sm:$0xf]
    %v395 = vld [vmem:[%s4 + $0x134] sm:$0xf]
    %v396 = vld [vmem:[%s4 + $0x138] sm:$0xf]
    %v397 = vld [vmem:[%s4 + $0x13c] sm:$0xf]
    %v398 = vld [vmem:[%s5] sm:$0x1]
    %v400 = vlaneseq
    %v401 = vshrl.u32 %v400, 7
    %v402 = vsub.s32 0, %v401
    %v403 = vrot.slane %v398, %v402
    %v485 = vunpack.c.l.b16 %v318
    %v486 = vunpack.c.l.b16 %v319
    %v487 = vunpack.c.l.b16 %v320
    %v488 = vunpack.c.l.b16 %v321
    %v489 = vunpack.c.l.b16 %v322
    %v490 = vunpack.c.l.b16 %v323
    %v491 = vunpack.c.l.b16 %v324
    %v492 = vunpack.c.l.b16 %v325
    %v493 = vunpack.c.l.b16 %v326
    %v494 = vunpack.c.l.b16 %v327
    %v495 = vunpack.c.l.b16 %v328
    %v496 = vunpack.c.l.b16 %v329
    %v497 = vunpack.c.l.b16 %v330
    %v498 = vunpack.c.l.b16 %v331
    %v499 = vunpack.c.l.b16 %v332
    %v500 = vunpack.c.l.b16 %v333
    %v501 = vunpack.c.l.b16 %v334
    %v502 = vunpack.c.l.b16 %v335
    %v503 = vunpack.c.l.b16 %v336
    %v504 = vunpack.c.l.b16 %v337
    %v505 = vunpack.c.l.b16 %v338
    %v506 = vunpack.c.l.b16 %v339
    %v507 = vunpack.c.l.b16 %v340
    %v508 = vunpack.c.l.b16 %v341
    %v509 = vunpack.c.l.b16 %v342
    %v510 = vunpack.c.l.b16 %v343
    %v511 = vunpack.c.l.b16 %v344
    %v512 = vunpack.c.l.b16 %v345
    %v513 = vunpack.c.l.b16 %v346
    %v514 = vunpack.c.l.b16 %v347
    %v515 = vunpack.c.l.b16 %v348
    %v516 = vunpack.c.l.b16 %v349
    %v517 = vunpack.c.l.b16 %v350
    %v518 = vunpack.c.l.b16 %v351
    %v519 = vunpack.c.l.b16 %v352
    %v520 = vunpack.c.l.b16 %v353
    %v521 = vunpack.c.l.b16 %v354
    %v522 = vunpack.c.l.b16 %v355
    %v523 = vunpack.c.l.b16 %v356
    %v524 = vunpack.c.l.b16 %v357
    %v525 = vunpack.c.l.b16 %v358
    %v526 = vunpack.c.l.b16 %v359
    %v527 = vunpack.c.l.b16 %v360
    %v528 = vunpack.c.l.b16 %v361
    %v529 = vunpack.c.l.b16 %v362
    %v530 = vunpack.c.l.b16 %v363
    %v531 = vunpack.c.l.b16 %v364
    %v532 = vunpack.c.l.b16 %v365
    %v533 = vunpack.c.l.b16 %v366
    %v534 = vunpack.c.l.b16 %v367
    %v535 = vunpack.c.l.b16 %v368
    %v536 = vunpack.c.l.b16 %v369
    %v537 = vunpack.c.l.b16 %v370
    %v538 = vunpack.c.l.b16 %v371
    %v539 = vunpack.c.l.b16 %v372
    %v540 = vunpack.c.l.b16 %v373
    %v541 = vunpack.c.l.b16 %v374
    %v542 = vunpack.c.l.b16 %v375
    %v543 = vunpack.c.l.b16 %v376
    %v544 = vunpack.c.l.b16 %v377
    %v545 = vunpack.c.l.b16 %v378
    %v546 = vunpack.c.l.b16 %v379
    %v547 = vunpack.c.l.b16 %v380
    %v548 = vunpack.c.l.b16 %v381
    %v549 = vunpack.c.l.b16 %v382
    %v550 = vunpack.c.l.b16 %v383
    %v551 = vunpack.c.l.b16 %v384
    %v552 = vunpack.c.l.b16 %v385
    %v553 = vunpack.c.l.b16 %v386
    %v554 = vunpack.c.l.b16 %v387
    %v555 = vunpack.c.l.b16 %v388
    %v556 = vunpack.c.l.b16 %v389
    %v557 = vunpack.c.l.b16 %v390
    %v558 = vunpack.c.l.b16 %v391
    %v559 = vunpack.c.l.b16 %v392
    %v560 = vunpack.c.l.b16 %v393
    %v561 = vunpack.c.l.b16 %v394
    %v562 = vunpack.c.l.b16 %v395
    %v563 = vunpack.c.l.b16 %v396
    %v564 = vunpack.c.l.b16 %v397
    %v565 = vpack.c.b16 %v486, %v485
    %v566 = vpack.c.b16 %v488, %v487
    %v567 = vpack.c.b16 %v490, %v489
    %v568 = vpack.c.b16 %v492, %v491
    %v569 = vpack.c.b16 %v494, %v493
    %v570 = vpack.c.b16 %v496, %v495
    %v571 = vpack.c.b16 %v498, %v497
    %v572 = vpack.c.b16 %v500, %v499
    %v573 = vpack.c.b16 %v502, %v501
    %v574 = vpack.c.b16 %v504, %v503
    %v575 = vpack.c.b16 %v506, %v505
    %v576 = vpack.c.b16 %v508, %v507
    %v577 = vpack.c.b16 %v510, %v509
    %v578 = vpack.c.b16 %v512, %v511
    %v579 = vpack.c.b16 %v514, %v513
    %v580 = vpack.c.b16 %v516, %v515
    %v581 = vpack.c.b16 %v518, %v517
    %v582 = vpack.c.b16 %v520, %v519
    %v583 = vpack.c.b16 %v522, %v521
    %v584 = vpack.c.b16 %v524, %v523
    %v585 = vpack.c.b16 %v526, %v525
    %v586 = vpack.c.b16 %v528, %v527
    %v587 = vpack.c.b16 %v530, %v529
    %v588 = vpack.c.b16 %v532, %v531
    %v589 = vpack.c.b16 %v534, %v533
    %v590 = vpack.c.b16 %v536, %v535
    %v591 = vpack.c.b16 %v538, %v537
    %v592 = vpack.c.b16 %v540, %v539
    %v593 = vpack.c.b16 %v542, %v541
    %v594 = vpack.c.b16 %v544, %v543
    %v595 = vpack.c.b16 %v546, %v545
    %v596 = vpack.c.b16 %v548, %v547
    %v597 = vpack.c.b16 %v550, %v549
    %v598 = vpack.c.b16 %v552, %v551
    %v599 = vpack.c.b16 %v554, %v553
    %v600 = vpack.c.b16 %v556, %v555
    %v601 = vpack.c.b16 %v558, %v557
    %v602 = vpack.c.b16 %v560, %v559
    %v603 = vpack.c.b16 %v562, %v561
    %v604 = vpack.c.b16 %v564, %v563
    %645 = vmatprep.subr.bf16.mxu0 0
    %646 = vmatpush1.bf16.msra.mxu0 %v565
    %647 = vmatprep.subr.bf16.mxu0 0
    %648 = vmatpush1.bf16.msra.mxu0 %v566
    %649 = vmatprep.subr.bf16.mxu0 0
    %650 = vmatpush1.bf16.msra.mxu0 %v567
    %651 = vmatprep.subr.bf16.mxu0 0
    %652 = vmatpush1.bf16.msra.mxu0 %v568
    %653 = vmatprep.subr.bf16.mxu0 0
    %654 = vmatpush1.bf16.msra.mxu0 %v569
    %655 = vmatprep.subr.bf16.mxu0 0
    %656 = vmatpush1.bf16.msra.mxu0 %v570
    %657 = vmatprep.subr.bf16.mxu0 0
    %658 = vmatpush1.bf16.msra.mxu0 %v571
    %659 = vmatprep.subr.bf16.mxu0 0
    %660 = vmatpush1.bf16.msra.mxu0 %v572
    %661 = vmatprep.subr.bf16.mxu0 0
    %662 = vmatpush1.bf16.msra.mxu0 %v573
    %663 = vmatprep.subr.bf16.mxu0 0
    %664 = vmatpush1.bf16.msra.mxu0 %v574
    %665 = vmatprep.subr.bf16.mxu0 0
    %666 = vmatpush1.bf16.msra.mxu0 %v575
    %667 = vmatprep.subr.bf16.mxu0 0
    %668 = vmatpush1.bf16.msra.mxu0 %v576
    %669 = vmatprep.subr.bf16.mxu0 0
    %670 = vmatpush1.bf16.msra.mxu0 %v577
    %671 = vmatprep.subr.bf16.mxu0 0
    %672 = vmatpush1.bf16.msra.mxu0 %v578
    %673 = vmatprep.subr.bf16.mxu0 0
    %674 = vmatpush1.bf16.msra.mxu0 %v579
    %675 = vmatprep.subr.bf16.mxu0 0
    %676 = vmatpush1.bf16.msra.mxu0 %v580
    %677 = vmatprep.mubr.bf16.mxu0 %v309
    %678 = vmatmul.mubr.bf16.gmra.mrb[0].mxu0 %v308
    %v679 = vpop.f32.mrb[0].mxu0
    %v680 = vadd.f32 %v403, %v679
    %v681 = vpop.f32.mrb[0].mxu0
    %v682 = vpop.f32.mrb[0].mxu0
    %v683 = vadd.f32 %v403, %v682
    %v684 = vpop.f32.mrb[0].mxu0
    %685 = vmatprep.mubr.bf16.mxu0 %v311
    %686 = vmatmul.mubr.bf16.gmra.mrb[0].mxu0 %v310
    %v687 = vpop.f32.mrb[0].mxu0
    %v688 = vadd.f32 %v403, %v687
    %v689 = vpop.f32.mrb[0].mxu0
    %v690 = vpop.f32.mrb[0].mxu0
    %v691 = vadd.f32 %v403, %v690
    %v692 = vpop.f32.mrb[0].mxu0
    %693 = vmatprep.mubr.bf16.mxu0 %v313
    %694 = vmatmul.mubr.bf16.gmra.mrb[0].mxu0 %v312
    %v695 = vpop.f32.mrb[0].mxu0
    %v696 = vadd.f32 %v403, %v695
    %v697 = vpop.f32.mrb[0].mxu0
    %v698 = vpop.f32.mrb[0].mxu0
    %v699 = vadd.f32 %v403, %v698
    %v700 = vpop.f32.mrb[0].mxu0
    %701 = vmatprep.mubr.bf16.mxu0 %v315
    %702 = vmatmul.mubr.bf16.gmra.mrb[0].mxu0 %v314
    %v703 = vpop.f32.mrb[0].mxu0
    %v704 = vadd.f32 %v403, %v703
    %v705 = vpop.f32.mrb[0].mxu0
    %v706 = vpop.f32.mrb[0].mxu0
    %v707 = vadd.f32 %v403, %v706
    %v708 = vpop.f32.mrb[0].mxu0
    %709 = vdwg.mxu0
    %710 = vmatprep.subr.bf16.mxu0 0
    %711 = vmatpush1.bf16.msra.mxu0 %v581
    %712 = vmatprep.subr.bf16.mxu0 0
    %713 = vmatpush1.bf16.msra.mxu0 %v582
    %714 = vmatprep.subr.bf16.mxu0 0
    %715 = vmatpush1.bf16.msra.mxu0 %v583
    %716 = vmatprep.subr.bf16.mxu0 0
    %717 = vmatpush1.bf16.msra.mxu0 %v584
    %718 = vmatprep.subr.bf16.mxu0 0
    %719 = vmatpush1.bf16.msra.mxu0 %v585
    %720 = vmatprep.subr.bf16.mxu0 0
    %721 = vmatpush1.bf16.msra.mxu0 %v586
    %722 = vmatprep.subr.bf16.mxu0 0
    %723 = vmatpush1.bf16.msra.mxu0 %v587
    %724 = vmatprep.subr.bf16.mxu0 0
    %725 = vmatpush1.bf16.msra.mxu0 %v588
    %726 = vmatprep.subr.bf16.mxu0 0
    %727 = vmatpush1.bf16.msra.mxu0 %v589
    %728 = vmatprep.subr.bf16.mxu0 0
    %729 = vmatpush1.bf16.msra.mxu0 %v590
    %730 = vmatprep.subr.bf16.mxu0 0
    %731 = vmatpush1.bf16.msra.mxu0 %v591
    %732 = vmatprep.subr.bf16.mxu0 0
    %733 = vmatpush1.bf16.msra.mxu0 %v592
    %734 = vmatprep.subr.bf16.mxu0 0
    %735 = vmatpush1.bf16.msra.mxu0 %v593
    %736 = vmatprep.subr.bf16.mxu0 0
    %737 = vmatpush1.bf16.msra.mxu0 %v594
    %738 = vmatprep.subr.bf16.mxu0 0
    %739 = vmatpush1.bf16.msra.mxu0 %v595
    %740 = vmatprep.subr.bf16.mxu0 0
    %741 = vmatpush1.bf16.msra.mxu0 %v596
    %742 = vmatprep.mubr.bf16.mxu0 %v311
    %743 = vmatmul.mubr.bf16.gmra.mrb[0].mxu0 %v310
    %v744 = vpop.f32.mrb[0].mxu0
    %v745 = vadd.f32 %v680, %v744
    %v746 = vpop.f32.mrb[0].mxu0
    %v747 = vpop.f32.mrb[0].mxu0
    %v748 = vadd.f32 %v683, %v747
    %v749 = vpop.f32.mrb[0].mxu0
    %750 = vmatprep.mubr.bf16.mxu0 %v313
    %751 = vmatmul.mubr.bf16.gmra.mrb[0].mxu0 %v312
    %v752 = vpop.f32.mrb[0].mxu0
    %v753 = vadd.f32 %v688, %v752
    %v754 = vpop.f32.mrb[0].mxu0
    %v755 = vpop.f32.mrb[0].mxu0
    %v756 = vadd.f32 %v691, %v755
    %v757 = vpop.f32.mrb[0].mxu0
    %758 = vmatprep.mubr.bf16.mxu0 %v315
    %759 = vmatmul.mubr.bf16.gmra.mrb[0].mxu0 %v314
    %v760 = vpop.f32.mrb[0].mxu0
    %v761 = vadd.f32 %v696, %v760
    %v762 = vpop.f32.mrb[0].mxu0
    %v763 = vpop.f32.mrb[0].mxu0
    %v764 = vadd.f32 %v699, %v763
    %v765 = vpop.f32.mrb[0].mxu0
    %766 = vmatprep.mubr.bf16.mxu0 %v317
    %767 = vmatmul.mubr.bf16.gmra.mrb[0].mxu0 %v316
    %v768 = vpop.f32.mrb[0].mxu0
    %v769 = vadd.f32 %v704, %v768
    %v770 = vpop.f32.mrb[0].mxu0
    %v771 = vpop.f32.mrb[0].mxu0
    %v772 = vadd.f32 %v707, %v771
    %v773 = vpop.f32.mrb[0].mxu0
    %774 = vdwg.mxu0
    %775 = vmatprep.subr.bf16.mxu0 0
    %776 = vmatpush1.bf16.msra.mxu0 %v597
    %777 = vmatprep.subr.bf16.mxu0 0
    %778 = vmatpush1.bf16.msra.mxu0 %v598
    %779 = vmatprep.subr.bf16.mxu0 0
    %780 = vmatpush1.bf16.msra.mxu0 %v599
    %781 = vmatprep.subr.bf16.mxu0 0
    %782 = vmatpush1.bf16.msra.mxu0 %v600
    %783 = vmatprep.subr.bf16.mxu0 0
    %784 = vmatpush1.bf16.msra.mxu0 %v601
    %785 = vmatprep.subr.bf16.mxu0 0
    %786 = vmatpush1.bf16.msra.mxu0 %v602
    %787 = vmatprep.subr.bf16.mxu0 0
    %788 = vmatpush1.bf16.msra.mxu0 %v603
    %789 = vmatprep.subr.bf16.mxu0 0
    %790 = vmatpush1.bf16.msra.mxu0 %v604
    %791 = vmatprep.subr.bf16.mxu0 0
    %792 = vmatpush1.bf16.msra.mxu0 0
    %793 = vmatprep.subr.bf16.mxu0 0
    %794 = vmatpush1.bf16.msra.mxu0 0
    %795 = vmatprep.subr.bf16.mxu0 0
    %796 = vmatpush1.bf16.msra.mxu0 0
    %797 = vmatprep.subr.bf16.mxu0 0
    %798 = vmatpush1.bf16.msra.mxu0 0
    %799 = vmatprep.subr.bf16.mxu0 0
    %800 = vmatpush1.bf16.msra.mxu0 0
    %801 = vmatprep.subr.bf16.mxu0 0
    %802 = vmatpush1.bf16.msra.mxu0 0
    %803 = vmatprep.subr.bf16.mxu0 0
    %804 = vmatpush1.bf16.msra.mxu0 0
    %805 = vmatprep.subr.bf16.mxu0 0
    %806 = vmatpush1.bf16.msra.mxu0 0
    %807 = vmatprep.mubr.bf16.mxu0 0
    %808 = vmatmul.mubr.bf16.gmra.mrb[0].mxu0 %v312
    %v809 = vpop.f32.mrb[0].mxu0
    %v810 = vadd.f32 %v745, %v809
    %v811 = vpop.f32.mrb[0].mxu0
    %v812 = vpop.f32.mrb[0].mxu0
    %v813 = vadd.f32 %v748, %v812
    %v814 = vpop.f32.mrb[0].mxu0
    %815 = vmatprep.mubr.bf16.mxu0 0
    %816 = vmatmul.mubr.bf16.gmra.mrb[0].mxu0 %v314
    %v817 = vpop.f32.mrb[0].mxu0
    %v818 = vadd.f32 %v753, %v817
    %v819 = vpop.f32.mrb[0].mxu0
    %v820 = vpop.f32.mrb[0].mxu0
    %v821 = vadd.f32 %v756, %v820
    %v822 = vpop.f32.mrb[0].mxu0
    %823 = vmatprep.mubr.bf16.mxu0 0
    %824 = vmatmul.mubr.bf16.gmra.mrb[0].mxu0 %v316
    %v825 = vpop.f32.mrb[0].mxu0
    %v826 = vadd.f32 %v761, %v825
    %v827 = vpop.f32.mrb[0].mxu0
    %v828 = vpop.f32.mrb[0].mxu0
    %v829 = vadd.f32 %v764, %v828
    %v830 = vpop.f32.mrb[0].mxu0
    %831 = vmatprep.mubr.bf16.mxu0 0
    %832 = vmatmul.mubr.bf16.gmra.mrb[0].mxu0 %v308
    %v833 = vpop.f32.mrb[0].mxu0
    %v834 = vadd.f32 %v769, %v833
    %v835 = vpop.f32.mrb[0].mxu0
    %v836 = vpop.f32.mrb[0].mxu0
    %v837 = vadd.f32 %v772, %v836
    %v838 = vpop.f32.mrb[0].mxu0
    %839 = vdwg.mxu0
    %v840 = vmax.f32 %v810, %v813
    %v841 = vmax.f32 %v818, %v821
    %v842 = vmax.f32 %v826, %v829
    %v843 = vmax.f32 %v834, %v837
    %s844 = smul.u32 4, 64
    %s845 = smul.u32 %s844, 4
    %s846 = sshll.u32 %s845, 4
    %847 = dma.done [#allocation4], %s846
    %v848 = vpack.c.bf16 %v840, %v840
    %v849 = vpack.c.bf16 %v841, %v841
    %v850 = vpack.c.bf16 %v842, %v842
    %v851 = vpack.c.bf16 %v843, %v843
    %v852 = vld [vmem:[#allocation2] sm:$0xff]
    %v853 = vld [vmem:[#allocation2 + $0x8] sm:$0xff]
    %v854 = vld [vmem:[#allocation2 + $0x10] sm:$0xff]
    %v855 = vld [vmem:[#allocation2 + $0x18] sm:$0xff]
    %v856 = vld [vmem:[#allocation2 + $0x20] sm:$0xff]
    %v857 = vld [vmem:[#allocation2 + $0x28] sm:$0xff]
    %v858 = vld [vmem:[#allocation2 + $0x30] sm:$0xff]
    %v859 = vld [vmem:[#allocation2 + $0x38] sm:$0xff]
    %v860 = vld [vmem:[#allocation2 + $0x40] sm:$0xff]
    %v861 = vld [vmem:[#allocation2 + $0x48] sm:$0xff]
    %v862 = vld [vmem:[#allocation2 + $0x50] sm:$0xff]
    %v863 = vld [vmem:[#allocation2 + $0x58] sm:$0xff]
    %v864 = vld [vmem:[#allocation2 + $0x60] sm:$0xff]
    %v865 = vld [vmem:[#allocation2 + $0x68] sm:$0xff]
    %v866 = vld [vmem:[#allocation2 + $0x70] sm:$0xff]
    %v867 = vld [vmem:[#allocation2 + $0x78] sm:$0xff]
    %v868 = vld [vmem:[#allocation2 + $0x80] sm:$0xff]
    %v869 = vld [vmem:[#allocation2 + $0x88] sm:$0xff]
    %v870 = vld [vmem:[#allocation2 + $0x90] sm:$0xff]
    %v871 = vld [vmem:[#allocation2 + $0x98] sm:$0xff]
    %v872 = vld [vmem:[#allocation2 + $0xa0] sm:$0xff]
    %v873 = vld [vmem:[#allocation2 + $0xa8] sm:$0xff]
    %v874 = vld [vmem:[#allocation2 + $0xb0] sm:$0xff]
    %v875 = vld [vmem:[#allocation2 + $0xb8] sm:$0xff]
    %v876 = vld [vmem:[#allocation2 + $0xc0] sm:$0xff]
    %v877 = vld [vmem:[#allocation2 + $0xc8] sm:$0xff]
    %v878 = vld [vmem:[#allocation2 + $0xd0] sm:$0xff]
    %v879 = vld [vmem:[#allocation2 + $0xd8] sm:$0xff]
    %v880 = vld [vmem:[#allocation2 + $0xe0] sm:$0xff]
    %v881 = vld [vmem:[#allocation2 + $0xe8] sm:$0xff]
    %v882 = vld [vmem:[#allocation2 + $0xf0] sm:$0xff]
    %v883 = vld [vmem:[#allocation2 + $0xf8] sm:$0xff]
    %v884 = vld [vmem:[#allocation2 + $0x100] sm:$0xff]
    %v885 = vld [vmem:[#allocation2 + $0x108] sm:$0xff]
    %v886 = vld [vmem:[#allocation2 + $0x110] sm:$0xff]
    %v887 = vld [vmem:[#allocation2 + $0x118] sm:$0xff]
    %v888 = vld [vmem:[#allocation2 + $0x120] sm:$0xff]
    %v889 = vld [vmem:[#allocation2 + $0x128] sm:$0xff]
    %v890 = vld [vmem:[#allocation2 + $0x130] sm:$0xff]
    %v891 = vld [vmem:[#allocation2 + $0x138] sm:$0xff]
    %v892 = vld [vmem:[#allocation2 + $0x140] sm:$0xff]
    %v893 = vld [vmem:[#allocation2 + $0x148] sm:$0xff]
    %v894 = vld [vmem:[#allocation2 + $0x150] sm:$0xff]
    %v895 = vld [vmem:[#allocation2 + $0x158] sm:$0xff]
    %v896 = vld [vmem:[#allocation2 + $0x160] sm:$0xff]
    %v897 = vld [vmem:[#allocation2 + $0x168] sm:$0xff]
    %v898 = vld [vmem:[#allocation2 + $0x170] sm:$0xff]
    %v899 = vld [vmem:[#allocation2 + $0x178] sm:$0xff]
    %v900 = vld [vmem:[#allocation2 + $0x180] sm:$0xff]
    %v901 = vld [vmem:[#allocation2 + $0x188] sm:$0xff]
    %v902 = vld [vmem:[#allocation2 + $0x190] sm:$0xff]
    %v903 = vld [vmem:[#allocation2 + $0x198] sm:$0xff]
    %v904 = vld [vmem:[#allocation2 + $0x1a0] sm:$0xff]
    %v905 = vld [vmem:[#allocation2 + $0x1a8] sm:$0xff]
    %v906 = vld [vmem:[#allocation2 + $0x1b0] sm:$0xff]
    %v907 = vld [vmem:[#allocation2 + $0x1b8] sm:$0xff]
    %v908 = vld [vmem:[#allocation2 + $0x1c0] sm:$0xff]
    %v909 = vld [vmem:[#allocation2 + $0x1c8] sm:$0xff]
    %v910 = vld [vmem:[#allocation2 + $0x1d0] sm:$0xff]
    %v911 = vld [vmem:[#allocation2 + $0x1d8] sm:$0xff]
    %v912 = vld [vmem:[#allocation2 + $0x1e0] sm:$0xff]
    %v913 = vld [vmem:[#allocation2 + $0x1e8] sm:$0xff]
    %v914 = vld [vmem:[#allocation2 + $0x1f0] sm:$0xff]
    %v915 = vld [vmem:[#allocation2 + $0x1f8] sm:$0xff]
    %v916 = vld [vmem:[#allocation2 + $0x200] sm:$0xff]
    %v917 = vld [vmem:[#allocation2 + $0x208] sm:$0xff]
    %v918 = vld [vmem:[#allocation2 + $0x210] sm:$0xff]
    %v919 = vld [vmem:[#allocation2 + $0x218] sm:$0xff]
    %v920 = vld [vmem:[#allocation2 + $0x220] sm:$0xff]
    %v921 = vld [vmem:[#allocation2 + $0x228] sm:$0xff]
    %v922 = vld [vmem:[#allocation2 + $0x230] sm:$0xff]
    %v923 = vld [vmem:[#allocation2 + $0x238] sm:$0xff]
    %v924 = vld [vmem:[#allocation2 + $0x240] sm:$0xff]
    %v925 = vld [vmem:[#allocation2 + $0x248] sm:$0xff]
    %v926 = vld [vmem:[#allocation2 + $0x250] sm:$0xff]
    %v927 = vld [vmem:[#allocation2 + $0x258] sm:$0xff]
    %v928 = vld [vmem:[#allocation2 + $0x260] sm:$0xff]
    %v929 = vld [vmem:[#allocation2 + $0x268] sm:$0xff]
    %v930 = vld [vmem:[#allocation2 + $0x270] sm:$0xff]
    %v931 = vld [vmem:[#allocation2 + $0x278] sm:$0xff]
    %v932 = vld [vmem:[#allocation2 + $0x280] sm:$0xff]
    %v933 = vld [vmem:[#allocation2 + $0x288] sm:$0xff]
    %v934 = vld [vmem:[#allocation2 + $0x290] sm:$0xff]
    %v935 = vld [vmem:[#allocation2 + $0x298] sm:$0xff]
    %v936 = vld [vmem:[#allocation2 + $0x2a0] sm:$0xff]
    %v937 = vld [vmem:[#allocation2 + $0x2a8] sm:$0xff]
    %v938 = vld [vmem:[#allocation2 + $0x2b0] sm:$0xff]
    %v939 = vld [vmem:[#allocation2 + $0x2b8] sm:$0xff]
    %v940 = vld [vmem:[#allocation2 + $0x2c0] sm:$0xff]
    %v941 = vld [vmem:[#allocation2 + $0x2c8] sm:$0xff]
    %v942 = vld [vmem:[#allocation2 + $0x2d0] sm:$0xff]
    %v943 = vld [vmem:[#allocation2 + $0x2d8] sm:$0xff]
    %v944 = vld [vmem:[#allocation2 + $0x2e0] sm:$0xff]
    %v945 = vld [vmem:[#allocation2 + $0x2e8] sm:$0xff]
    %v946 = vld [vmem:[#allocation2 + $0x2f0] sm:$0xff]
    %v947 = vld [vmem:[#allocation2 + $0x2f8] sm:$0xff]
    %v948 = vld [vmem:[#allocation2 + $0x300] sm:$0xff]
    %v949 = vld [vmem:[#allocation2 + $0x308] sm:$0xff]
    %v950 = vld [vmem:[#allocation2 + $0x310] sm:$0xff]
    %v951 = vld [vmem:[#allocation2 + $0x318] sm:$0xff]
    %v952 = vld [vmem:[#allocation2 + $0x320] sm:$0xff]
    %v953 = vld [vmem:[#allocation2 + $0x328] sm:$0xff]
    %v954 = vld [vmem:[#allocation2 + $0x330] sm:$0xff]
    %v955 = vld [vmem:[#allocation2 + $0x338] sm:$0xff]
    %v956 = vld [vmem:[#allocation2 + $0x340] sm:$0xff]
    %v957 = vld [vmem:[#allocation2 + $0x348] sm:$0xff]
    %v958 = vld [vmem:[#allocation2 + $0x350] sm:$0xff]
    %v959 = vld [vmem:[#allocation2 + $0x358] sm:$0xff]
    %v960 = vld [vmem:[#allocation2 + $0x360] sm:$0xff]
    %v961 = vld [vmem:[#allocation2 + $0x368] sm:$0xff]
    %v962 = vld [vmem:[#allocation2 + $0x370] sm:$0xff]
    %v963 = vld [vmem:[#allocation2 + $0x378] sm:$0xff]
    %v964 = vld [vmem:[#allocation2 + $0x380] sm:$0xff]
    %v965 = vld [vmem:[#allocation2 + $0x388] sm:$0xff]
    %v966 = vld [vmem:[#allocation2 + $0x390] sm:$0xff]
    %v967 = vld [vmem:[#allocation2 + $0x398] sm:$0xff]
    %v968 = vld [vmem:[#allocation2 + $0x3a0] sm:$0xff]
    %v969 = vld [vmem:[#allocation2 + $0x3a8] sm:$0xff]
    %v970 = vld [vmem:[#allocation2 + $0x3b0] sm:$0xff]
    %v971 = vld [vmem:[#allocation2 + $0x3b8] sm:$0xff]
    %v972 = vld [vmem:[#allocation2 + $0x3c0] sm:$0xff]
    %v973 = vld [vmem:[#allocation2 + $0x3c8] sm:$0xff]
    %v974 = vld [vmem:[#allocation2 + $0x3d0] sm:$0xff]
    %v975 = vld [vmem:[#allocation2 + $0x3d8] sm:$0xff]
    %v976 = vld [vmem:[#allocation2 + $0x3e0] sm:$0xff]
    %v977 = vld [vmem:[#allocation2 + $0x3e8] sm:$0xff]
    %v978 = vld [vmem:[#allocation2 + $0x3f0] sm:$0xff]
    %v979 = vld [vmem:[#allocation2 + $0x3f8] sm:$0xff]
    %v980 = vld [vmem:[%s7] sm:$0xf]
    %v982 = vlaneseq
    %v983 = vshrl.u32 %v982, 7
    %v984 = vsub.s32 0, %v983
    %v985 = vrot.slane %v980, %v984
    %v986 = vlaneseq
    %v987 = vshrl.u32 %v986, 7
    %v988 = vsub.s32 1, %v987
    %v989 = vrot.slane %v980, %v988
    %v990 = vlaneseq
    %v991 = vshrl.u32 %v990, 7
    %v992 = vsub.s32 2, %v991
    %v993 = vrot.slane %v980, %v992
    %v994 = vlaneseq
    %v995 = vshrl.u32 %v994, 7
    %v996 = vsub.s32 3, %v995
    %v997 = vrot.slane %v980, %v996
    %1002 = vmatprep.subr.bf16.mxu0 %v853
    %1003 = vmatpush1.bf16.msra.mxu0 %v852
    %1004 = vmatprep.subr.bf16.mxu0 %v857
    %1005 = vmatpush1.bf16.msra.mxu0 %v856
    %1006 = vmatprep.subr.bf16.mxu0 %v861
    %1007 = vmatpush1.bf16.msra.mxu0 %v860
    %1008 = vmatprep.subr.bf16.mxu0 %v865
    %1009 = vmatpush1.bf16.msra.mxu0 %v864
    %1010 = vmatprep.subr.bf16.mxu0 %v869
    %1011 = vmatpush1.bf16.msra.mxu0 %v868
    %1012 = vmatprep.subr.bf16.mxu0 %v873
    %1013 = vmatpush1.bf16.msra.mxu0 %v872
    %1014 = vmatprep.subr.bf16.mxu0 %v877
    %1015 = vmatpush1.bf16.msra.mxu0 %v876
    %1016 = vmatprep.subr.bf16.mxu0 %v881
    %1017 = vmatpush1.bf16.msra.mxu0 %v880
    %1018 = vmatprep.subr.bf16.mxu0 %v885
    %1019 = vmatpush1.bf16.msra.mxu0 %v884
    %1020 = vmatprep.subr.bf16.mxu0 %v889
    %1021 = vmatpush1.bf16.msra.mxu0 %v888
    %1022 = vmatprep.subr.bf16.mxu0 %v893
    %1023 = vmatpush1.bf16.msra.mxu0 %v892
    %1024 = vmatprep.subr.bf16.mxu0 %v897
    %1025 = vmatpush1.bf16.msra.mxu0 %v896
    %1026 = vmatprep.subr.bf16.mxu0 %v901
    %1027 = vmatpush1.bf16.msra.mxu0 %v900
    %1028 = vmatprep.subr.bf16.mxu0 %v905
    %1029 = vmatpush1.bf16.msra.mxu0 %v904
    %1030 = vmatprep.subr.bf16.mxu0 %v909
    %1031 = vmatpush1.bf16.msra.mxu0 %v908
    %1032 = vmatprep.subr.bf16.mxu0 %v913
    %1033 = vmatpush1.bf16.msra.mxu0 %v912
    %1034 = vmatprep.mubr.bf16.mxu0 %v849
    %1035 = vmatmul.mubr.bf16.gmra.mrb[0].mxu0 %v848
    %v1036 = vpop.f32.mrb[0].mxu0
    %v1037 = vadd.f32 %v985, %v1036
    %v1038 = vpop.f32.mrb[0].mxu0
    %v1039 = vadd.f32 %v989, %v1038
    %v1040 = vpop.f32.mrb[0].mxu0
    %v1041 = vpop.f32.mrb[0].mxu0
    %1042 = vdwg.mxu0
    %1043 = vmatprep.subr.bf16.mxu0 %v917
    %1044 = vmatpush1.bf16.msra.mxu0 %v916
    %1045 = vmatprep.subr.bf16.mxu0 %v921
    %1046 = vmatpush1.bf16.msra.mxu0 %v920
    %1047 = vmatprep.subr.bf16.mxu0 %v925
    %1048 = vmatpush1.bf16.msra.mxu0 %v924
    %1049 = vmatprep.subr.bf16.mxu0 %v929
    %1050 = vmatpush1.bf16.msra.mxu0 %v928
    %1051 = vmatprep.subr.bf16.mxu0 %v933
    %1052 = vmatpush1.bf16.msra.mxu0 %v932
    %1053 = vmatprep.subr.bf16.mxu0 %v937
    %1054 = vmatpush1.bf16.msra.mxu0 %v936
    %1055 = vmatprep.subr.bf16.mxu0 %v941
    %1056 = vmatpush1.bf16.msra.mxu0 %v940
    %1057 = vmatprep.subr.bf16.mxu0 %v945
    %1058 = vmatpush1.bf16.msra.mxu0 %v944
    %1059 = vmatprep.subr.bf16.mxu0 %v949
    %1060 = vmatpush1.bf16.msra.mxu0 %v948
    %1061 = vmatprep.subr.bf16.mxu0 %v953
    %1062 = vmatpush1.bf16.msra.mxu0 %v952
    %1063 = vmatprep.subr.bf16.mxu0 %v957
    %1064 = vmatpush1.bf16.msra.mxu0 %v956
    %1065 = vmatprep.subr.bf16.mxu0 %v961
    %1066 = vmatpush1.bf16.msra.mxu0 %v960
    %1067 = vmatprep.subr.bf16.mxu0 %v965
    %1068 = vmatpush1.bf16.msra.mxu0 %v964
    %1069 = vmatprep.subr.bf16.mxu0 %v969
    %1070 = vmatpush1.bf16.msra.mxu0 %v968
    %1071 = vmatprep.subr.bf16.mxu0 %v973
    %1072 = vmatpush1.bf16.msra.mxu0 %v972
    %1073 = vmatprep.subr.bf16.mxu0 %v977
    %1074 = vmatpush1.bf16.msra.mxu0 %v976
    %1075 = vmatprep.mubr.bf16.mxu0 %v851
    %1076 = vmatmul.mubr.bf16.gmra.mrb[0].mxu0 %v850
    %v1077 = vpop.f32.mrb[0].mxu0
    %v1078 = vadd.f32 %v1037, %v1077
    %v1079 = vpop.f32.mrb[0].mxu0
    %v1080 = vadd.f32 %v1039, %v1079
    %v1081 = vpop.f32.mrb[0].mxu0
    %v1082 = vpop.f32.mrb[0].mxu0
    %1083 = vdwg.mxu0
    %1084 = vmatprep.subr.bf16.mxu0 %v855
    %1085 = vmatpush1.bf16.msra.mxu0 %v854
    %1086 = vmatprep.subr.bf16.mxu0 %v859
    %1087 = vmatpush1.bf16.msra.mxu0 %v858
    %1088 = vmatprep.subr.bf16.mxu0 %v863
    %1089 = vmatpush1.bf16.msra.mxu0 %v862
    %1090 = vmatprep.subr.bf16.mxu0 %v867
    %1091 = vmatpush1.bf16.msra.mxu0 %v866
    %1092 = vmatprep.subr.bf16.mxu0 %v871
    %1093 = vmatpush1.bf16.msra.mxu0 %v870
    %1094 = vmatprep.subr.bf16.mxu0 %v875
    %1095 = vmatpush1.bf16.msra.mxu0 %v874
    %1096 = vmatprep.subr.bf16.mxu0 %v879
    %1097 = vmatpush1.bf16.msra.mxu0 %v878
    %1098 = vmatprep.subr.bf16.mxu0 %v883
    %1099 = vmatpush1.bf16.msra.mxu0 %v882
    %1100 = vmatprep.subr.bf16.mxu0 %v887
    %1101 = vmatpush1.bf16.msra.mxu0 %v886
    %1102 = vmatprep.subr.bf16.mxu0 %v891
    %1103 = vmatpush1.bf16.msra.mxu0 %v890
    %1104 = vmatprep.subr.bf16.mxu0 %v895
    %1105 = vmatpush1.bf16.msra.mxu0 %v894
    %1106 = vmatprep.subr.bf16.mxu0 %v899
    %1107 = vmatpush1.bf16.msra.mxu0 %v898
    %1108 = vmatprep.subr.bf16.mxu0 %v903
    %1109 = vmatpush1.bf16.msra.mxu0 %v902
    %1110 = vmatprep.subr.bf16.mxu0 %v907
    %1111 = vmatpush1.bf16.msra.mxu0 %v906
    %1112 = vmatprep.subr.bf16.mxu0 %v911
    %1113 = vmatpush1.bf16.msra.mxu0 %v910
    %1114 = vmatprep.subr.bf16.mxu0 %v915
    %1115 = vmatpush1.bf16.msra.mxu0 %v914
    %1116 = vmatprep.mubr.bf16.mxu0 %v849
    %1117 = vmatmul.mubr.bf16.gmra.mrb[0].mxu0 %v848
    %v1118 = vpop.f32.mrb[0].mxu0
    %v1119 = vadd.f32 %v993, %v1118
    %v1120 = vpop.f32.mrb[0].mxu0
    %v1121 = vadd.f32 %v997, %v1120
    %v1122 = vpop.f32.mrb[0].mxu0
    %v1123 = vpop.f32.mrb[0].mxu0
    %1124 = vdwg.mxu0
    %1125 = vmatprep.subr.bf16.mxu0 %v919
    %1126 = vmatpush1.bf16.msra.mxu0 %v918
    %1127 = vmatprep.subr.bf16.mxu0 %v923
    %1128 = vmatpush1.bf16.msra.mxu0 %v922
    %1129 = vmatprep.subr.bf16.mxu0 %v927
    %1130 = vmatpush1.bf16.msra.mxu0 %v926
    %1131 = vmatprep.subr.bf16.mxu0 %v931
    %1132 = vmatpush1.bf16.msra.mxu0 %v930
    %1133 = vmatprep.subr.bf16.mxu0 %v935
    %1134 = vmatpush1.bf16.msra.mxu0 %v934
    %1135 = vmatprep.subr.bf16.mxu0 %v939
    %1136 = vmatpush1.bf16.msra.mxu0 %v938
    %1137 = vmatprep.subr.bf16.mxu0 %v943
    %1138 = vmatpush1.bf16.msra.mxu0 %v942
    %1139 = vmatprep.subr.bf16.mxu0 %v947
    %1140 = vmatpush1.bf16.msra.mxu0 %v946
    %1141 = vmatprep.subr.bf16.mxu0 %v951
    %1142 = vmatpush1.bf16.msra.mxu0 %v950
    %1143 = vmatprep.subr.bf16.mxu0 %v955
    %1144 = vmatpush1.bf16.msra.mxu0 %v954
    %1145 = vmatprep.subr.bf16.mxu0 %v959
    %1146 = vmatpush1.bf16.msra.mxu0 %v958
    %1147 = vmatprep.subr.bf16.mxu0 %v963
    %1148 = vmatpush1.bf16.msra.mxu0 %v962
    %1149 = vmatprep.subr.bf16.mxu0 %v967
    %1150 = vmatpush1.bf16.msra.mxu0 %v966
    %1151 = vmatprep.subr.bf16.mxu0 %v971
    %1152 = vmatpush1.bf16.msra.mxu0 %v970
    %1153 = vmatprep.subr.bf16.mxu0 %v975
    %1154 = vmatpush1.bf16.msra.mxu0 %v974
    %1155 = vmatprep.subr.bf16.mxu0 %v979
    %1156 = vmatpush1.bf16.msra.mxu0 %v978
    %1157 = vmatprep.mubr.bf16.mxu0 %v851
    %1158 = vmatmul.mubr.bf16.gmra.mrb[0].mxu0 %v850
    %v1159 = vpop.f32.mrb[0].mxu0
    %v1160 = vadd.f32 %v1119, %v1159
    %v1161 = vpop.f32.mrb[0].mxu0
    %v1162 = vadd.f32 %v1121, %v1161
    %v1163 = vpop.f32.mrb[0].mxu0
    %v1164 = vpop.f32.mrb[0].mxu0
    %1165 = vdwg.mxu0
    %v1166 = vmax.f32 %v1078, 0.0
    %v1167 = vmax.f32 %v1080, 0.0
    %v1168 = vmax.f32 %v1160, 0.0
    %v1169 = vmax.f32 %v1162, 0.0
    %s1170 = smul.u32 %s844, 1
    %s1171 = sshll.u32 %s1170, 4
    %1172 = dma.done %s70, %s1171
    %v1173 = vpack.c.bf16 %v1166, %v1166
    %v1174 = vpack.c.bf16 %v1167, %v1167
    %v1175 = vpack.c.bf16 %v1168, %v1168
    %v1176 = vpack.c.bf16 %v1169, %v1169
    %v1177 = vld [vmem:[#allocation3] sm:$0xff]
    %v1178 = vld [vmem:[#allocation3 + $0x8] sm:$0xff]
    %v1179 = vld [vmem:[#allocation3 + $0x10] sm:$0xff]
    %v1180 = vld [vmem:[#allocation3 + $0x18] sm:$0xff]
    %v1181 = vld [vmem:[#allocation3 + $0x20] sm:$0xff]
    %v1182 = vld [vmem:[#allocation3 + $0x28] sm:$0xff]
    %v1183 = vld [vmem:[#allocation3 + $0x30] sm:$0xff]
    %v1184 = vld [vmem:[#allocation3 + $0x38] sm:$0xff]
    %v1185 = vld [vmem:[#allocation3 + $0x40] sm:$0xff]
    %v1186 = vld [vmem:[#allocation3 + $0x48] sm:$0xff]
    %v1187 = vld [vmem:[#allocation3 + $0x50] sm:$0xff]
    %v1188 = vld [vmem:[#allocation3 + $0x58] sm:$0xff]
    %v1189 = vld [vmem:[#allocation3 + $0x60] sm:$0xff]
    %v1190 = vld [vmem:[#allocation3 + $0x68] sm:$0xff]
    %v1191 = vld [vmem:[#allocation3 + $0x70] sm:$0xff]
    %v1192 = vld [vmem:[#allocation3 + $0x78] sm:$0xff]
    %v1193 = vld [vmem:[#allocation3 + $0x80] sm:$0xff]
    %v1194 = vld [vmem:[#allocation3 + $0x88] sm:$0xff]
    %v1195 = vld [vmem:[#allocation3 + $0x90] sm:$0xff]
    %v1196 = vld [vmem:[#allocation3 + $0x98] sm:$0xff]
    %v1197 = vld [vmem:[#allocation3 + $0xa0] sm:$0xff]
    %v1198 = vld [vmem:[#allocation3 + $0xa8] sm:$0xff]
    %v1199 = vld [vmem:[#allocation3 + $0xb0] sm:$0xff]
    %v1200 = vld [vmem:[#allocation3 + $0xb8] sm:$0xff]
    %v1201 = vld [vmem:[#allocation3 + $0xc0] sm:$0xff]
    %v1202 = vld [vmem:[#allocation3 + $0xc8] sm:$0xff]
    %v1203 = vld [vmem:[#allocation3 + $0xd0] sm:$0xff]
    %v1204 = vld [vmem:[#allocation3 + $0xd8] sm:$0xff]
    %v1205 = vld [vmem:[#allocation3 + $0xe0] sm:$0xff]
    %v1206 = vld [vmem:[#allocation3 + $0xe8] sm:$0xff]
    %v1207 = vld [vmem:[#allocation3 + $0xf0] sm:$0xff]
    %v1208 = vld [vmem:[#allocation3 + $0xf8] sm:$0xff]
    %v1209 = vld [vmem:[%s1] sm:$0xff]
    %v1210 = vld [vmem:[%s9] sm:$0x1]
    %1212 = vset.pattern.permute.xlu0 0
    %1213 = vperm.xlu0 %1212, %v1209
    %v1214 = vpop.permute.xlu0 %1213
    %v1217 = vlaneseq
    %v1218 = vshrl.u32 %v1217, 7
    %v1219 = vsub.s32 0, %v1218
    %v1220 = vrot.slane %v1210, %v1219
    %v1222 = vmul.f32 %v1214, %v1220
    %1223 = vmatprep.subr.bf16.mxu0 0
    %1224 = vmatpush1.bf16.msra.mxu0 %v1177
    %1225 = vmatprep.subr.bf16.mxu0 0
    %1226 = vmatpush1.bf16.msra.mxu0 %v1178
    %1227 = vmatprep.subr.bf16.mxu0 0
    %1228 = vmatpush1.bf16.msra.mxu0 %v1179
    %1229 = vmatprep.subr.bf16.mxu0 0
    %1230 = vmatpush1.bf16.msra.mxu0 %v1180
    %1231 = vmatprep.subr.bf16.mxu0 0
    %1232 = vmatpush1.bf16.msra.mxu0 %v1181
    %1233 = vmatprep.subr.bf16.mxu0 0
    %1234 = vmatpush1.bf16.msra.mxu0 %v1182
    %1235 = vmatprep.subr.bf16.mxu0 0
    %1236 = vmatpush1.bf16.msra.mxu0 %v1183
    %1237 = vmatprep.subr.bf16.mxu0 0
    %1238 = vmatpush1.bf16.msra.mxu0 %v1184
    %1239 = vmatprep.subr.bf16.mxu0 0
    %1240 = vmatpush1.bf16.msra.mxu0 %v1185
    %1241 = vmatprep.subr.bf16.mxu0 0
    %1242 = vmatpush1.bf16.msra.mxu0 %v1186
    %1243 = vmatprep.subr.bf16.mxu0 0
    %1244 = vmatpush1.bf16.msra.mxu0 %v1187
    %1245 = vmatprep.subr.bf16.mxu0 0
    %1246 = vmatpush1.bf16.msra.mxu0 %v1188
    %1247 = vmatprep.subr.bf16.mxu0 0
    %1248 = vmatpush1.bf16.msra.mxu0 %v1189
    %1249 = vmatprep.subr.bf16.mxu0 0
    %1250 = vmatpush1.bf16.msra.mxu0 %v1190
    %1251 = vmatprep.subr.bf16.mxu0 0
    %1252 = vmatpush1.bf16.msra.mxu0 %v1191
    %1253 = vmatprep.subr.bf16.mxu0 0
    %1254 = vmatpush1.bf16.msra.mxu0 %v1192
    %1255 = vmatprep.mubr.bf16.mxu0 %v1174
    %1256 = vmatmul.mubr.bf16.gmra.mrb[0].mxu0 %v1173
    %v1257 = vpop.f32.mrb[0].mxu0
    %v1258 = vadd.f32 %v1222, %v1257
    %v1259 = vpop.f32.mrb[0].mxu0
    %v1260 = vpop.f32.mrb[0].mxu0
    %v1261 = vpop.f32.mrb[0].mxu0
    %1262 = vdwg.mxu0
    %1263 = vmatprep.subr.bf16.mxu0 0
    %1264 = vmatpush1.bf16.msra.mxu0 %v1193
    %1265 = vmatprep.subr.bf16.mxu0 0
    %1266 = vmatpush1.bf16.msra.mxu0 %v1194
    %1267 = vmatprep.subr.bf16.mxu0 0
    %1268 = vmatpush1.bf16.msra.mxu0 %v1195
    %1269 = vmatprep.subr.bf16.mxu0 0
    %1270 = vmatpush1.bf16.msra.mxu0 %v1196
    %1271 = vmatprep.subr.bf16.mxu0 0
    %1272 = vmatpush1.bf16.msra.mxu0 %v1197
    %1273 = vmatprep.subr.bf16.mxu0 0
    %1274 = vmatpush1.bf16.msra.mxu0 %v1198
    %1275 = vmatprep.subr.bf16.mxu0 0
    %1276 = vmatpush1.bf16.msra.mxu0 %v1199
    %1277 = vmatprep.subr.bf16.mxu0 0
    %1278 = vmatpush1.bf16.msra.mxu0 %v1200
    %1279 = vmatprep.subr.bf16.mxu0 0
    %1280 = vmatpush1.bf16.msra.mxu0 %v1201
    %1281 = vmatprep.subr.bf16.mxu0 0
    %1282 = vmatpush1.bf16.msra.mxu0 %v1202
    %1283 = vmatprep.subr.bf16.mxu0 0
    %1284 = vmatpush1.bf16.msra.mxu0 %v1203
    %1285 = vmatprep.subr.bf16.mxu0 0
    %1286 = vmatpush1.bf16.msra.mxu0 %v1204
    %1287 = vmatprep.subr.bf16.mxu0 0
    %1288 = vmatpush1.bf16.msra.mxu0 %v1205
    %1289 = vmatprep.subr.bf16.mxu0 0
    %1290 = vmatpush1.bf16.msra.mxu0 %v1206
    %1291 = vmatprep.subr.bf16.mxu0 0
    %1292 = vmatpush1.bf16.msra.mxu0 %v1207
    %1293 = vmatprep.subr.bf16.mxu0 0
    %1294 = vmatpush1.bf16.msra.mxu0 %v1208
    %1295 = vmatprep.mubr.bf16.mxu0 %v1176
    %1296 = vmatmul.mubr.bf16.gmra.mrb[0].mxu0 %v1175
    %v1297 = vpop.f32.mrb[0].mxu0
    %v1298 = vadd.f32 %v1258, %v1297
    %v1299 = vpop.f32.mrb[0].mxu0
    %v1300 = vpop.f32.mrb[0].mxu0
    %v1301 = vpop.f32.mrb[0].mxu0
    %1302 = vdwg.mxu0
    %v1303 = vld [vmem:[%s10] sm:$0x1]
    %v1305 = vlaneseq
    %v1306 = vshrl.u32 %v1305, 7
    %v1307 = vsub.s32 0, %v1306
    %v1308 = vrot.slane %v1303, %v1307
    %v1310 = vadd.f32 %v1298, %v1308
    %v1311 = vlaneseq
    %v1312 = vand.u32 %v1311, 127
    %vm1313 = vcmp.ge.s32.totalorder %v1312, 2
    %vm1314 = vcmp.lt.s32.totalorder %v1312, 5
    %vm1315 = vmand %vm1313, %vm1314
    %v1316 = vand.u32 2147483647, %v1310
    %v1317 = vsel %vm1315, %v1316, %v1310
    %1318 = vst [vmem:[%s11] sm:$0xff] %v1317
    // Predicated region
    $region42: #{lenet_forward.1} parent=1 // pred_check
      _
    $region43: #{lenet_forward.1} parent=1 // pred_check_branch
      %1320 = sbr.rel (0) target = $region45
    $region44: #{lenet_forward.1} parent=1 // pred_region
      _
    $region45: #{lenet_forward.1} parent=1 // pred_fallthru
      _
    // Predicated region
    $region46: #{lenet_forward.1} parent=1 // pred_check
      _
    $region47: #{lenet_forward.1} parent=1 // pred_check_branch
      %1322 = sbr.rel (0) target = $region49
    $region48: #{lenet_forward.1} parent=1 // pred_region
      _
    $region49: #{lenet_forward.1} parent=1 // pred_fallthru
      _
  %1323 = vsyncmov [#allocation4]
  %s1324 = vpop.sfrf %1323
  %p1325 = scmp.eq.s32.totalorder %s1324, 0
  %p1326 = pneg %p1325
  %1328 = shalt.err (%p1326)
  %s1329 = scalar_lea.sflag [#allocation4], 1
  %1330 = vsyncmov %s1329
  %s1331 = vpop.sfrf %1330
  %p1332 = scmp.eq.s32.totalorder %s1331, 0
  %p1333 = pneg %p1332
  %1335 = shalt.err (%p1333)

</llo_original>
